<compile_context>
chip_gen: v6e
topology: v6e:2x2x1
jax: 0.10.0
libtpu: 0.0.40
codegen_flags: <defaults>
</compile_context>

<pallas_src>
import functools

import jax
import jax.numpy as jnp
import numpy as np
from jax import lax
from jax.experimental import pallas as pl
from jax.experimental.pallas import tpu as pltpu


def _heads_kernel(*refs, num_heads, head_size, block_future_tokens,
                  separate_q, q_tile_size):
    """One grid step == (one batch element, one query tile)."""
    if separate_q:
        (xq_ref, xkv_ref, wq_ref, wk_ref, wv_ref, wl_ref, bl_ref,
         o_ref, q_scr, k_scr, v_scr, cat_scr) = refs
    else:
        (xkv_ref, wq_ref, wk_ref, wv_ref, wl_ref, bl_ref,
         o_ref, q_scr, k_scr, v_scr, cat_scr) = refs
        xq_ref = xkv_ref

    hs = head_size
    tq = q_tile_size
    cdtype = k_scr.dtype                     # MXU feed dtype (f32 or bf16)
    j = pl.program_id(1)

    # ---- Per-batch projection cache: runs only on the first query tile. ----
    @pl.when(j == 0)
    def _():
        xkv = xkv_ref[0]                                             # (Tkv, E)
        k_scr[...] = jnp.dot(xkv, wk_ref[...],
                             preferred_element_type=jnp.float32).astype(cdtype)
        v_scr[...] = jnp.dot(xkv, wv_ref[...],
                             preferred_element_type=jnp.float32).astype(cdtype)
        xq = xq_ref[0] if separate_q else xkv                        # (Tq_pad, E)
        q_scr[...] = jnp.dot(xq, wq_ref[...],
                             preferred_element_type=jnp.float32).astype(cdtype)

    # ---- Attention for this query tile (K/V read from cache). ----
    q0 = pl.multiple_of(j * tq, tq)
    q = q_scr[pl.ds(q0, tq), :]                                      # (Tq, E)
    k = k_scr[...]                                                   # (Tkv, E)
    v = v_scr[...]                                                   # (Tkv, E)
    tkv = k.shape[0]

    if block_future_tokens:
        # Additive causal bias for this tile (0 visible, -1e30 future).
        q_pos = q0 + lax.broadcasted_iota(jnp.int32, (tq, tkv), 0)
        k_pos = lax.broadcasted_iota(jnp.int32, (tq, tkv), 1)
        bias = jnp.where(k_pos <= q_pos, 0.0, -1e30).astype(jnp.float32)

    for h in range(num_heads):
        qh = q[:, h * hs:(h + 1) * hs]                               # (Tq, Hs)
        kh = k[:, h * hs:(h + 1) * hs]                               # (Tkv, Hs)
        vh = v[:, h * hs:(h + 1) * hs]                               # (Tkv, Hs)

        # scores = q_h @ k_h^T (contraction over Hs); 1/sqrt(E) folded into Wq.
        s = lax.dot_general(qh, kh, (((1,), (1,)), ((), ())),
                            preferred_element_type=jnp.float32)      # (Tq, Tkv)
        if block_future_tokens:
            s = s + bias

        # Numerically stable softmax numerator in f32 (v5e-friendly).
        s = s - jnp.max(s, axis=-1, keepdims=True)
        p = jnp.exp(s)
        l = jnp.sum(p, axis=-1, keepdims=True)                       # (Tq, 1)

        # PV matmul on un-normalized probabilities; normalize the small result.
        oh = jnp.dot(p.astype(cdtype), vh,
                     preferred_element_type=jnp.float32)             # (Tq, Hs)
        oh = oh * (1.0 / l)                                          # exact

        # Lane-slice write into the (Tq, H*Hs) f32 concat buffer (no concat op,
        # no per-head K=Hs output matmul).
        cat_scr[:, h * hs:(h + 1) * hs] = oh

    # One wide output projection: (Tq, E) @ (E, E), plus bias, lane-dense out.
    out = jnp.dot(cat_scr[...].astype(cdtype), wl_ref[...],
                  preferred_element_type=jnp.float32)
    out = out + bl_ref[...]
    o_ref[0] = out.astype(o_ref.dtype)


def heads_forward(x, wq, wk, wv, wl, bl, *, encoder_x=None,
                  block_future_tokens=True, q_tile=256, mxu_dtype=None):
    """x: (B, T, E); wq/wk/wv: (H, E, Hs); wl: (H*Hs, E); bl: (1, E).

    mxu_dtype: optional dtype (e.g. jnp.bfloat16) for MXU feeds; accumulation
    and softmax math stay f32; output keeps x.dtype.
    """
    b, t, e = x.shape
    h, _, hs = wq.shape
    assert h * hs == e, "embedding_dimension must equal num_heads * head_size"
    out_dtype = x.dtype

    x_kv = x if encoder_x is None else encoder_x
    t_kv = x_kv.shape[1]

    # Query tiling: pad T up to a tile multiple instead of degenerating to one
    # giant tile (keeps live scores at (tq, Tkv) and preserves megacore work).
    tq = min(q_tile, t)
    n_q = -(-t // tq)
    t_q_pad = n_q * tq

    cdtype = jnp.dtype(mxu_dtype) if mxu_dtype is not None else x.dtype

    # Restack per-head weights into lane-dense slabs; fold 1/sqrt(E) into Wq.
    scale = 1.0 / (e ** 0.5)
    wq_s = (jnp.transpose(wq, (1, 0, 2)).reshape(e, h * hs) * scale).astype(cdtype)
    wk_s = jnp.transpose(wk, (1, 0, 2)).reshape(e, h * hs).astype(cdtype)
    wv_s = jnp.transpose(wv, (1, 0, 2)).reshape(e, h * hs).astype(cdtype)
    wl_c = wl.astype(cdtype)                       # (H*Hs, E): one wide matmul
    bl_f = bl.astype(jnp.float32)

    x_kv_c = x_kv.astype(cdtype)

    # Only feed a separate query stream when we actually need one.
    separate_q = (encoder_x is not None) or (t_q_pad != t)

    inputs = []
    in_specs = []
    if separate_q:
        xq_c = x.astype(cdtype)
        if t_q_pad != t:
            xq_c = jnp.pad(xq_c, ((0, 0), (0, t_q_pad - t), (0, 0)))
        inputs.append(xq_c)
        in_specs.append(pl.BlockSpec((1, t_q_pad, e), lambda i, j: (i, 0, 0)))
    inputs.append(x_kv_c)
    in_specs.append(pl.BlockSpec((1, t_kv, e), lambda i, j: (i, 0, 0)))
    inputs += [wq_s, wk_s, wv_s, wl_c, bl_f]
    in_specs += [
        pl.BlockSpec((e, h * hs), lambda i, j: (0, 0)),     # Wq (scaled)
        pl.BlockSpec((e, h * hs), lambda i, j: (0, 0)),     # Wk
        pl.BlockSpec((e, h * hs), lambda i, j: (0, 0)),     # Wv
        pl.BlockSpec((h * hs, e), lambda i, j: (0, 0)),     # Wl
        pl.BlockSpec((1, e), lambda i, j: (0, 0)),          # bias (f32)
    ]

    kernel = functools.partial(
        _heads_kernel,
        num_heads=h,
        head_size=hs,
        block_future_tokens=block_future_tokens,
        separate_q=separate_q,
        q_tile_size=tq,
    )

    out = pl.pallas_call(
        kernel,
        out_shape=jax.ShapeDtypeStruct((b, t_q_pad, e), out_dtype),
        grid_spec=pltpu.PrefetchScalarGridSpec(
            num_scalar_prefetch=0,
            grid=(b, n_q),
            in_specs=in_specs,
            out_specs=pl.BlockSpec((1, tq, e), lambda i, j: (i, j, 0)),
            scratch_shapes=[
                pltpu.VMEM((t_q_pad, e), cdtype),   # Q cache (whole padded seq)
                pltpu.VMEM((t_kv, e), cdtype),      # K cache (per batch elem)
                pltpu.VMEM((t_kv, e), cdtype),      # V cache (per batch elem)
                pltpu.VMEM((tq, e), jnp.float32),   # per-tile head concat buf
            ],
        ),
        compiler_params=pltpu.CompilerParams(
            # Batch axis parallel (megacore); query-tile axis MUST be
            # "arbitrary" so the j==0 projection cache is always initialized.
            dimension_semantics=("parallel", "arbitrary"),
        ),
    )(*inputs)
    return out[:, :t, :]


def heads_reference(x, wq, wk, wv, wl, bl, *, encoder_x=None,
                    block_future_tokens=True):
    """Pure-JAX reference mirroring the PyTorch module (eval mode)."""
    b, t, e = x.shape
    enc = x if encoder_x is None else encoder_x
    t_enc = enc.shape[1]
    h, _, hs = wq.shape
    outs = []
    for i in range(h):
        q = x @ wq[i]
        k = enc @ wk[i]
        v = enc @ wv[i]
        w = (q @ jnp.swapaxes(k, -1, -2)) / (e ** 0.5)
        if block_future_tokens:
            mask = jnp.tril(jnp.ones((t, t_enc)))
            w = jnp.where(mask == 0, -jnp.inf, w)
        w = jax.nn.softmax(w, axis=-1)
        outs.append(w @ v)
    cat = jnp.concatenate(outs, axis=-1)
    return cat @ wl + bl


if __name__ == "__main__":
    # Small shapes: batch=2, seq(block_size)=8, embedding=32, heads=4 -> head_size=8
    B, T, E, H = 2, 8, 32, 4
    HS = E // H

    key = jax.random.PRNGKey(0)
    kx, ke, kq, kk, kv, kl, kb = jax.random.split(key, 7)

    bound_proj = 1.0 / np.sqrt(E)       # nn.Linear default init bound (fan_in = E)
    bound_out = 1.0 / np.sqrt(H * HS)   # final linear fan_in = H*HS

    x = jax.random.normal(kx, (B, T, E), dtype=jnp.float32)
    enc = jax.random.normal(ke, (B, T, E), dtype=jnp.float32)
    wq = jax.random.uniform(kq, (H, E, HS), jnp.float32, -bound_proj, bound_proj)
    wk = jax.random.uniform(kk, (H, E, HS), jnp.float32, -bound_proj, bound_proj)
    wv = jax.random.uniform(kv, (H, E, HS), jnp.float32, -bound_proj, bound_proj)
    wl = jax.random.uniform(kl, (H * HS, E), jnp.float32, -bound_out, bound_out)
    bl = jax.random.uniform(kb, (1, E), jnp.float32, -bound_out, bound_out)

    # 1) Causal self-attention, f32 MXU feeds (tight check).
    ref = heads_reference(x, wq, wk, wv, wl, bl, block_future_tokens=True)
    out = heads_forward(x, wq, wk, wv, wl, bl, block_future_tokens=True)
    out = jax.block_until_ready(out)
    np.testing.assert_allclose(np.asarray(out), np.asarray(ref),
                               rtol=2e-3, atol=2e-3)

    # 2) Causal self-attention, bf16 MXU feeds (loose check: bf16 numerics).
    out_bf16 = heads_forward(x, wq, wk, wv, wl, bl, block_future_tokens=True,
                             mxu_dtype=jnp.bfloat16)
    out_bf16 = jax.block_until_ready(out_bf16)
    np.testing.assert_allclose(np.asarray(out_bf16), np.asarray(ref),
                               rtol=5e-2, atol=5e-2)

    # 3) Non-causal cross-attention (exercises the separate query-stream path).
    ref_x = heads_reference(x, wq, wk, wv, wl, bl, encoder_x=enc,
                            block_future_tokens=False)
    out_x = heads_forward(x, wq, wk, wv, wl, bl, encoder_x=enc,
                          block_future_tokens=False)
    out_x = jax.block_until_ready(out_x)
    np.testing.assert_allclose(np.asarray(out_x), np.asarray(ref_x),
                               rtol=2e-3, atol=2e-3)

    print("KERNEL_OK")
</pallas_src>

<mosaic_0001>
module attributes {stable_mosaic.version = 11 : i64} {
  func.func @_heads_kernel(%arg0: i32, %arg1: i32, %arg2: memref<1x8x32xf32, #tpu.memory_space<vmem>>, %arg3: memref<32x32xf32, #tpu.memory_space<vmem>>, %arg4: memref<32x32xf32, #tpu.memory_space<vmem>>, %arg5: memref<32x32xf32, #tpu.memory_space<vmem>>, %arg6: memref<32x32xf32, #tpu.memory_space<vmem>>, %arg7: memref<1x32xf32, #tpu.memory_space<vmem>>, %arg8: memref<1x8x32xf32, #tpu.memory_space<vmem>>, %arg9: memref<8x32xf32, #tpu.memory_space<vmem>>, %arg10: memref<8x32xf32, #tpu.memory_space<vmem>>, %arg11: memref<8x32xf32, #tpu.memory_space<vmem>>, %arg12: memref<8x32xf32, #tpu.memory_space<vmem>>) attributes {dimension_semantics = [#tpu.dimension_semantics<parallel>, #tpu.dimension_semantics<arbitrary>], iteration_bounds = array<i64: 2, 1>, scalar_prefetch = 0 : i64, scratch_operands = 4 : i64, tpu.core_type = #tpu.core_type<tc>, window_params = [{transform_indices = @transform_0, window_bounds = array<i64: 1, 8, 32>}, {pipeline_mode = #tpu.pipeline_mode<synchronous>, transform_indices = @transform_1, window_bounds = array<i64: 32, 32>}, {pipeline_mode = #tpu.pipeline_mode<synchronous>, transform_indices = @transform_2, window_bounds = array<i64: 32, 32>}, {pipeline_mode = #tpu.pipeline_mode<synchronous>, transform_indices = @transform_3, window_bounds = array<i64: 32, 32>}, {pipeline_mode = #tpu.pipeline_mode<synchronous>, transform_indices = @transform_4, window_bounds = array<i64: 32, 32>}, {pipeline_mode = #tpu.pipeline_mode<synchronous>, transform_indices = @transform_5, window_bounds = array<i64: 1, 32>}, {transform_indices = @transform_6, window_bounds = array<i64: 1, 8, 32>}]} {
    %c0_i32 = arith.constant 0 : i32
    %0 = arith.cmpi eq, %arg1, %c0_i32 : i32
    %1 = arith.extui %0 : i1 to i32
    %c0_i32_0 = arith.constant 0 : i32
    %2 = arith.cmpi ne, %1, %c0_i32_0 : i32
    scf.if %2 {
      %c0_41 = arith.constant 0 : index
      %c0_42 = arith.constant 0 : index
      %c0_43 = arith.constant 0 : index
      %98 = vector.load %arg2[%c0_41, %c0_42, %c0_43] : memref<1x8x32xf32, #tpu.memory_space<vmem>>, vector<1x8x32xf32>
      %99 = vector.shape_cast %98 : vector<1x8x32xf32> to vector<8x32xf32>
      %c0_44 = arith.constant 0 : index
      %c0_45 = arith.constant 0 : index
      %100 = vector.load %arg4[%c0_44, %c0_45] : memref<32x32xf32, #tpu.memory_space<vmem>>, vector<32x32xf32>
      %cst_46 = arith.constant dense<0.000000e+00> : vector<8x32xf32>
      %101 = tpu.matmul %99, %100, %cst_46 {dimension_numbers = #tpu.dot_dimension_numbers<[1], [0], [0], [1], [0, 0, 1, 1], [], []>} : vector<8x32xf32>, vector<32x32xf32>, vector<8x32xf32> -> vector<8x32xf32>
      %c0_47 = arith.constant 0 : index
      %c0_48 = arith.constant 0 : index
      %102 = vector.load %arg10[%c0_47, %c0_48] : memref<8x32xf32, #tpu.memory_space<vmem>>, vector<8x32xf32>
      tpu.vector_store %arg10[%c0_47, %c0_48], %101 {strides = array<i32>} : memref<8x32xf32, #tpu.memory_space<vmem>>, vector<8x32xf32>,
      %c0_49 = arith.constant 0 : index
      %c0_50 = arith.constant 0 : index
      %103 = vector.load %arg5[%c0_49, %c0_50] : memref<32x32xf32, #tpu.memory_space<vmem>>, vector<32x32xf32>
      %cst_51 = arith.constant dense<0.000000e+00> : vector<8x32xf32>
      %104 = tpu.matmul %99, %103, %cst_51 {dimension_numbers = #tpu.dot_dimension_numbers<[1], [0], [0], [1], [0, 0, 1, 1], [], []>} : vector<8x32xf32>, vector<32x32xf32>, vector<8x32xf32> -> vector<8x32xf32>
      %c0_52 = arith.constant 0 : index
      %c0_53 = arith.constant 0 : index
      %105 = vector.load %arg11[%c0_52, %c0_53] : memref<8x32xf32, #tpu.memory_space<vmem>>, vector<8x32xf32>
      tpu.vector_store %arg11[%c0_52, %c0_53], %104 {strides = array<i32>} : memref<8x32xf32, #tpu.memory_space<vmem>>, vector<8x32xf32>,
      %c0_54 = arith.constant 0 : index
      %c0_55 = arith.constant 0 : index
      %106 = vector.load %arg3[%c0_54, %c0_55] : memref<32x32xf32, #tpu.memory_space<vmem>>, vector<32x32xf32>
      %cst_56 = arith.constant dense<0.000000e+00> : vector<8x32xf32>
      %107 = tpu.matmul %99, %106, %cst_56 {dimension_numbers = #tpu.dot_dimension_numbers<[1], [0], [0], [1], [0, 0, 1, 1], [], []>} : vector<8x32xf32>, vector<32x32xf32>, vector<8x32xf32> -> vector<8x32xf32>
      %c0_57 = arith.constant 0 : index
      %c0_58 = arith.constant 0 : index
      %108 = vector.load %arg9[%c0_57, %c0_58] : memref<8x32xf32, #tpu.memory_space<vmem>>, vector<8x32xf32>
      tpu.vector_store %arg9[%c0_57, %c0_58], %107 {strides = array<i32>} : memref<8x32xf32, #tpu.memory_space<vmem>>, vector<8x32xf32>,
    } else {
    }
    %c8_i32 = arith.constant 8 : i32
    %3 = arith.muli %arg1, %c8_i32 : i32
    %4 = tpu.assume_multiple %3, 8 : i32
    %5 = arith.index_cast %4 : i32 to index
    %c0 = arith.constant 0 : index
    %6 = vector.load %arg9[%5, %c0] : memref<8x32xf32, #tpu.memory_space<vmem>>, vector<8x32xf32>
    %c0_1 = arith.constant 0 : index
    %c0_2 = arith.constant 0 : index
    %7 = vector.load %arg10[%c0_1, %c0_2] : memref<8x32xf32, #tpu.memory_space<vmem>>, vector<8x32xf32>
    %c0_3 = arith.constant 0 : index
    %c0_4 = arith.constant 0 : index
    %8 = vector.load %arg11[%c0_3, %c0_4] : memref<8x32xf32, #tpu.memory_space<vmem>>, vector<8x32xf32>
    %9 = tpu.iota {dimensions = array<i32: 0>} : vector<8x8xi32>
    %10 = vector.broadcast %4 : i32 to vector<8x8xi32>
    %11 = arith.addi %10, %9 : vector<8x8xi32>
    %12 = tpu.iota {dimensions = array<i32: 1>} : vector<8x8xi32>
    %13 = arith.cmpi sle, %12, %11 : vector<8x8xi32>
    %cst = arith.constant 0.000000e+00 : f32
    %cst_5 = arith.constant -1.000000e+30 : f32
    %14 = vector.broadcast %cst : f32 to vector<8x8xf32>
    %15 = vector.broadcast %cst_5 : f32 to vector<8x8xf32>
    %16 = arith.select %13, %14, %15 : vector<8x8xi1>, vector<8x8xf32>
    %17 = vector.extract_strided_slice %6 {offsets = [0, 0], sizes = [8, 8], strides = [1, 1]} : vector<8x32xf32> to vector<8x8xf32>
    %18 = vector.extract_strided_slice %7 {offsets = [0, 0], sizes = [8, 8], strides = [1, 1]} : vector<8x32xf32> to vector<8x8xf32>
    %19 = vector.extract_strided_slice %8 {offsets = [0, 0], sizes = [8, 8], strides = [1, 1]} : vector<8x32xf32> to vector<8x8xf32>
    %cst_6 = arith.constant dense<0.000000e+00> : vector<8x8xf32>
    %20 = tpu.matmul %17, %18, %cst_6 {dimension_numbers = #tpu.dot_dimension_numbers<[1], [1], [0], [0], [0, 0, 1, 0], [], []>} : vector<8x8xf32>, vector<8x8xf32>, vector<8x8xf32> -> vector<8x8xf32>
    %21 = arith.addf %20, %16 : vector<8x8xf32>
    %cst_7 = arith.constant dense<0xFF800000> : vector<8xf32>
    %22 = vector.multi_reduction <maximumf>, %21, %cst_7 [1] : vector<8x8xf32> to vector<8xf32>
    %23 = vector.shape_cast %22 : vector<8xf32> to vector<8x1xf32>
    %24 = vector.broadcast %23 : vector<8x1xf32> to vector<8x8xf32>
    %25 = arith.subf %21, %24 : vector<8x8xf32>
    %26 = math.exp %25 : vector<8x8xf32>
    %cst_8 = arith.constant dense<0.000000e+00> : vector<8xf32>
    %27 = vector.multi_reduction <add>, %26, %cst_8 [1] : vector<8x8xf32> to vector<8xf32>
    %28 = vector.shape_cast %27 : vector<8xf32> to vector<8x1xf32>
    %cst_9 = arith.constant dense<0.000000e+00> : vector<8x8xf32>
    %29 = tpu.matmul %26, %19, %cst_9 {dimension_numbers = #tpu.dot_dimension_numbers<[1], [0], [0], [1], [0, 0, 1, 1], [], []>} : vector<8x8xf32>, vector<8x8xf32>, vector<8x8xf32> -> vector<8x8xf32>
    %cst_10 = arith.constant 1.000000e+00 : f32
    %30 = vector.broadcast %cst_10 : f32 to vector<8x1xf32>
    %31 = arith.divf %30, %28 : vector<8x1xf32>
    %32 = vector.broadcast %31 : vector<8x1xf32> to vector<8x8xf32>
    %33 = arith.mulf %29, %32 : vector<8x8xf32>
    %c0_11 = arith.constant 0 : index
    %c0_12 = arith.constant 0 : index
    %34 = vector.load %arg12[%c0_11, %c0_12] : memref<8x32xf32, #tpu.memory_space<vmem>>, vector<8x8xf32>
    tpu.vector_store %arg12[%c0_11, %c0_12], %33 {strides = array<i32>} : memref<8x32xf32, #tpu.memory_space<vmem>>, vector<8x8xf32>,
    %35 = vector.extract_strided_slice %6 {offsets = [0, 8], sizes = [8, 8], strides = [1, 1]} : vector<8x32xf32> to vector<8x8xf32>
    %36 = vector.extract_strided_slice %7 {offsets = [0, 8], sizes = [8, 8], strides = [1, 1]} : vector<8x32xf32> to vector<8x8xf32>
    %37 = vector.extract_strided_slice %8 {offsets = [0, 8], sizes = [8, 8], strides = [1, 1]} : vector<8x32xf32> to vector<8x8xf32>
    %cst_13 = arith.constant dense<0.000000e+00> : vector<8x8xf32>
    %38 = tpu.matmul %35, %36, %cst_13 {dimension_numbers = #tpu.dot_dimension_numbers<[1], [1], [0], [0], [0, 0, 1, 0], [], []>} : vector<8x8xf32>, vector<8x8xf32>, vector<8x8xf32> -> vector<8x8xf32>
    %39 = arith.addf %38, %16 : vector<8x8xf32>
    %cst_14 = arith.constant dense<0xFF800000> : vector<8xf32>
    %40 = vector.multi_reduction <maximumf>, %39, %cst_14 [1] : vector<8x8xf32> to vector<8xf32>
    %41 = vector.shape_cast %40 : vector<8xf32> to vector<8x1xf32>
    %42 = vector.broadcast %41 : vector<8x1xf32> to vector<8x8xf32>
    %43 = arith.subf %39, %42 : vector<8x8xf32>
    %44 = math.exp %43 : vector<8x8xf32>
    %cst_15 = arith.constant dense<0.000000e+00> : vector<8xf32>
    %45 = vector.multi_reduction <add>, %44, %cst_15 [1] : vector<8x8xf32> to vector<8xf32>
    %46 = vector.shape_cast %45 : vector<8xf32> to vector<8x1xf32>
    %cst_16 = arith.constant dense<0.000000e+00> : vector<8x8xf32>
    %47 = tpu.matmul %44, %37, %cst_16 {dimension_numbers = #tpu.dot_dimension_numbers<[1], [0], [0], [1], [0, 0, 1, 1], [], []>} : vector<8x8xf32>, vector<8x8xf32>, vector<8x8xf32> -> vector<8x8xf32>
    %cst_17 = arith.constant 1.000000e+00 : f32
    %48 = vector.broadcast %cst_17 : f32 to vector<8x1xf32>
    %49 = arith.divf %48, %46 : vector<8x1xf32>
    %50 = vector.broadcast %49 : vector<8x1xf32> to vector<8x8xf32>
    %51 = arith.mulf %47, %50 : vector<8x8xf32>
    %c0_18 = arith.constant 0 : index
    %c8 = arith.constant 8 : index
    %52 = vector.load %arg12[%c0_18, %c8] : memref<8x32xf32, #tpu.memory_space<vmem>>, vector<8x8xf32>
    tpu.vector_store %arg12[%c0_18, %c8], %51 {strides = array<i32>} : memref<8x32xf32, #tpu.memory_space<vmem>>, vector<8x8xf32>,
    %53 = vector.extract_strided_slice %6 {offsets = [0, 16], sizes = [8, 8], strides = [1, 1]} : vector<8x32xf32> to vector<8x8xf32>
    %54 = vector.extract_strided_slice %7 {offsets = [0, 16], sizes = [8, 8], strides = [1, 1]} : vector<8x32xf32> to vector<8x8xf32>
    %55 = vector.extract_strided_slice %8 {offsets = [0, 16], sizes = [8, 8], strides = [1, 1]} : vector<8x32xf32> to vector<8x8xf32>
    %cst_19 = arith.constant dense<0.000000e+00> : vector<8x8xf32>
    %56 = tpu.matmul %53, %54, %cst_19 {dimension_numbers = #tpu.dot_dimension_numbers<[1], [1], [0], [0], [0, 0, 1, 0], [], []>} : vector<8x8xf32>, vector<8x8xf32>, vector<8x8xf32> -> vector<8x8xf32>
    %57 = arith.addf %56, %16 : vector<8x8xf32>
    %cst_20 = arith.constant dense<0xFF800000> : vector<8xf32>
    %58 = vector.multi_reduction <maximumf>, %57, %cst_20 [1] : vector<8x8xf32> to vector<8xf32>
    %59 = vector.shape_cast %58 : vector<8xf32> to vector<8x1xf32>
    %60 = vector.broadcast %59 : vector<8x1xf32> to vector<8x8xf32>
    %61 = arith.subf %57, %60 : vector<8x8xf32>
    %62 = math.exp %61 : vector<8x8xf32>
    %cst_21 = arith.constant dense<0.000000e+00> : vector<8xf32>
    %63 = vector.multi_reduction <add>, %62, %cst_21 [1] : vector<8x8xf32> to vector<8xf32>
    %64 = vector.shape_cast %63 : vector<8xf32> to vector<8x1xf32>
    %cst_22 = arith.constant dense<0.000000e+00> : vector<8x8xf32>
    %65 = tpu.matmul %62, %55, %cst_22 {dimension_numbers = #tpu.dot_dimension_numbers<[1], [0], [0], [1], [0, 0, 1, 1], [], []>} : vector<8x8xf32>, vector<8x8xf32>, vector<8x8xf32> -> vector<8x8xf32>
    %cst_23 = arith.constant 1.000000e+00 : f32
    %66 = vector.broadcast %cst_23 : f32 to vector<8x1xf32>
    %67 = arith.divf %66, %64 : vector<8x1xf32>
    %68 = vector.broadcast %67 : vector<8x1xf32> to vector<8x8xf32>
    %69 = arith.mulf %65, %68 : vector<8x8xf32>
    %c0_24 = arith.constant 0 : index
    %c16 = arith.constant 16 : index
    %70 = vector.load %arg12[%c0_24, %c16] : memref<8x32xf32, #tpu.memory_space<vmem>>, vector<8x8xf32>
    tpu.vector_store %arg12[%c0_24, %c16], %69 {strides = array<i32>} : memref<8x32xf32, #tpu.memory_space<vmem>>, vector<8x8xf32>,
    %71 = vector.extract_strided_slice %6 {offsets = [0, 24], sizes = [8, 8], strides = [1, 1]} : vector<8x32xf32> to vector<8x8xf32>
    %72 = vector.extract_strided_slice %7 {offsets = [0, 24], sizes = [8, 8], strides = [1, 1]} : vector<8x32xf32> to vector<8x8xf32>
    %73 = vector.extract_strided_slice %8 {offsets = [0, 24], sizes = [8, 8], strides = [1, 1]} : vector<8x32xf32> to vector<8x8xf32>
    %cst_25 = arith.constant dense<0.000000e+00> : vector<8x8xf32>
    %74 = tpu.matmul %71, %72, %cst_25 {dimension_numbers = #tpu.dot_dimension_numbers<[1], [1], [0], [0], [0, 0, 1, 0], [], []>} : vector<8x8xf32>, vector<8x8xf32>, vector<8x8xf32> -> vector<8x8xf32>
    %75 = arith.addf %74, %16 : vector<8x8xf32>
    %cst_26 = arith.constant dense<0xFF800000> : vector<8xf32>
    %76 = vector.multi_reduction <maximumf>, %75, %cst_26 [1] : vector<8x8xf32> to vector<8xf32>
    %77 = vector.shape_cast %76 : vector<8xf32> to vector<8x1xf32>
    %78 = vector.broadcast %77 : vector<8x1xf32> to vector<8x8xf32>
    %79 = arith.subf %75, %78 : vector<8x8xf32>
    %80 = math.exp %79 : vector<8x8xf32>
    %cst_27 = arith.constant dense<0.000000e+00> : vector<8xf32>
    %81 = vector.multi_reduction <add>, %80, %cst_27 [1] : vector<8x8xf32> to vector<8xf32>
    %82 = vector.shape_cast %81 : vector<8xf32> to vector<8x1xf32>
    %cst_28 = arith.constant dense<0.000000e+00> : vector<8x8xf32>
    %83 = tpu.matmul %80, %73, %cst_28 {dimension_numbers = #tpu.dot_dimension_numbers<[1], [0], [0], [1], [0, 0, 1, 1], [], []>} : vector<8x8xf32>, vector<8x8xf32>, vector<8x8xf32> -> vector<8x8xf32>
    %cst_29 = arith.constant 1.000000e+00 : f32
    %84 = vector.broadcast %cst_29 : f32 to vector<8x1xf32>
    %85 = arith.divf %84, %82 : vector<8x1xf32>
    %86 = vector.broadcast %85 : vector<8x1xf32> to vector<8x8xf32>
    %87 = arith.mulf %83, %86 : vector<8x8xf32>
    %c0_30 = arith.constant 0 : index
    %c24 = arith.constant 24 : index
    %88 = vector.load %arg12[%c0_30, %c24] : memref<8x32xf32, #tpu.memory_space<vmem>>, vector<8x8xf32>
    tpu.vector_store %arg12[%c0_30, %c24], %87 {strides = array<i32>} : memref<8x32xf32, #tpu.memory_space<vmem>>, vector<8x8xf32>,
    %c0_31 = arith.constant 0 : index
    %c0_32 = arith.constant 0 : index
    %89 = vector.load %arg12[%c0_31, %c0_32] : memref<8x32xf32, #tpu.memory_space<vmem>>, vector<8x32xf32>
    %c0_33 = arith.constant 0 : index
    %c0_34 = arith.constant 0 : index
    %90 = vector.load %arg6[%c0_33, %c0_34] : memref<32x32xf32, #tpu.memory_space<vmem>>, vector<32x32xf32>
    %cst_35 = arith.constant dense<0.000000e+00> : vector<8x32xf32>
    %91 = tpu.matmul %89, %90, %cst_35 {dimension_numbers = #tpu.dot_dimension_numbers<[1], [0], [0], [1], [0, 0, 1, 1], [], []>} : vector<8x32xf32>, vector<32x32xf32>, vector<8x32xf32> -> vector<8x32xf32>
    %c0_36 = arith.constant 0 : index
    %c0_37 = arith.constant 0 : index
    %92 = vector.load %arg7[%c0_36, %c0_37] : memref<1x32xf32, #tpu.memory_space<vmem>>, vector<1x32xf32>
    %93 = vector.broadcast %92 : vector<1x32xf32> to vector<8x32xf32>
    %94 = arith.addf %91, %93 : vector<8x32xf32>
    %c0_38 = arith.constant 0 : index
    %c0_39 = arith.constant 0 : index
    %c0_40 = arith.constant 0 : index
    %95 = vector.load %arg8[%c0_38, %c0_39, %c0_40] : memref<1x8x32xf32, #tpu.memory_space<vmem>>, vector<1x8x32xf32>
    %96 = vector.shape_cast %95 : vector<1x8x32xf32> to vector<8x32xf32>
    %97 = vector.shape_cast %94 : vector<8x32xf32> to vector<1x8x32xf32>
    tpu.vector_store %arg8[%c0_38, %c0_39, %c0_40], %97 {strides = array<i32>} : memref<1x8x32xf32, #tpu.memory_space<vmem>>, vector<1x8x32xf32>,
    return
  }
  func.func @transform_0(%arg0: i32, %arg1: i32) -> (i32, i32, i32) {
    %c0_i32 = arith.constant 0 : i32
    %c0_i32_0 = arith.constant 0 : i32
    %c0_i32_1 = arith.constant 0 : i32
    return %arg0, %c0_i32, %c0_i32_0 : i32, i32, i32
  }
  func.func @transform_1(%arg0: i32, %arg1: i32) -> (i32, i32) {
    %c0_i32 = arith.constant 0 : i32
    %c0_i32_0 = arith.constant 0 : i32
    %c0_i32_1 = arith.constant 0 : i32
    return %c0_i32, %c0_i32_0 : i32, i32
  }
  func.func @transform_2(%arg0: i32, %arg1: i32) -> (i32, i32) {
    %c0_i32 = arith.constant 0 : i32
    %c0_i32_0 = arith.constant 0 : i32
    %c0_i32_1 = arith.constant 0 : i32
    return %c0_i32, %c0_i32_0 : i32, i32
  }
  func.func @transform_3(%arg0: i32, %arg1: i32) -> (i32, i32) {
    %c0_i32 = arith.constant 0 : i32
    %c0_i32_0 = arith.constant 0 : i32
    %c0_i32_1 = arith.constant 0 : i32
    return %c0_i32, %c0_i32_0 : i32, i32
  }
  func.func @transform_4(%arg0: i32, %arg1: i32) -> (i32, i32) {
    %c0_i32 = arith.constant 0 : i32
    %c0_i32_0 = arith.constant 0 : i32
    %c0_i32_1 = arith.constant 0 : i32
    return %c0_i32, %c0_i32_0 : i32, i32
  }
  func.func @transform_5(%arg0: i32, %arg1: i32) -> (i32, i32) {
    %c0_i32 = arith.constant 0 : i32
    %c0_i32_0 = arith.constant 0 : i32
    %c0_i32_1 = arith.constant 0 : i32
    return %c0_i32, %c0_i32_0 : i32, i32
  }
  func.func @transform_6(%arg0: i32, %arg1: i32) -> (i32, i32, i32) {
    %c0_i32 = arith.constant 0 : i32
    %c0_i32_0 = arith.constant 0 : i32
    return %arg0, %arg1, %c0_i32 : i32, i32, i32
  }
}

</mosaic_0001>

<llo_original>
// kernel: tpu_custom_call.1
$region0: #{tpu_custom_call.1}
  #allocation0 [shape = 'u32[]', space=smem, size = 0x4, offset = 0x4, fixed_abs, tag = 'smem constant byte address 0x4 - core index']
  #allocation1 [shape = 'u32[144,128]{1,0:T(1,128)}', space=vmem, size = 0x12000, scoped, tag = 'internal scratch']
  #allocation2 [shape = 'f32[8,32]{1,0:T(8,128)}', space=vmem, size = 0x1000, scoped, tag = 'scratch operand']
  #allocation3 [shape = 'f32[8,32]{1,0:T(8,128)}', space=vmem, size = 0x1000, scoped, tag = 'scratch operand']
  #allocation4 [shape = 'f32[8,32]{1,0:T(8,128)}', space=vmem, size = 0x1000, scoped, tag = 'scratch operand']
  #allocation5 [shape = 'f32[8,32]{1,0:T(8,128)}', space=vmem, size = 0x1000, scoped, tag = 'scratch operand']
  %s0 = inlined_call_operand.hbm [shape: f32[2,8,32], index: 0, kind: input, shape index: {}]
  %s1 = inlined_call_operand.hbm [shape: f32[32,32], index: 1, kind: input, shape index: {}]
  %s2 = inlined_call_operand.hbm [shape: f32[32,32], index: 2, kind: input, shape index: {}]
  %s3 = inlined_call_operand.hbm [shape: f32[32,32], index: 3, kind: input, shape index: {}]
  %s4 = inlined_call_operand.hbm [shape: f32[32,32], index: 4, kind: input, shape index: {}]
  %s5 = inlined_call_operand.vmem [shape: f32[1,32], index: 5, kind: input, shape index: {}]
  %s6 = inlined_call_operand.hbm [shape: f32[2,8,32], index: 6, kind: output, shape index: {}]
  %s7 = sld [smem:[#allocation0]]
  $region81: #{tpu_custom_call.1} parent=0
    _
  %s9 = ssub.s32 1, %s7
  %s10 = scalar_select 0, %s9, %s7
  $region1: #{tpu_custom_call.1} parent=0
    #allocation6 [shape = 'u8[8192]{0}', space=vmem, size = 0x2000, scoped, tag = 'input window, operand 0']
    #allocation7 [shape = 's32[2]{0}', space=sflag, size = 0x8, scoped, tag = 'scoped memory for tpu_custom_call.1']
    #allocation8 [shape = 's32[2]{0}', space=sflag, size = 0x8, scoped, tag = 'scoped memory for tpu_custom_call.1']
    #allocation9 [shape = 'u8[16384]{0}', space=vmem, size = 0x4000, scoped, tag = 'input window, operand 1, single buffered']
    #allocation10 [shape = 's32[1]{0}', space=sflag, size = 0x4, scoped, tag = 'scoped memory for tpu_custom_call.1']
    #allocation11 [shape = 'u8[16384]{0}', space=vmem, size = 0x4000, scoped, tag = 'input window, operand 2, single buffered']
    #allocation12 [shape = 'u8[16384]{0}', space=vmem, size = 0x4000, scoped, tag = 'input window, operand 3, single buffered']
    #allocation13 [shape = 's32[1]{0}', space=sflag, size = 0x4, scoped, tag = 'scoped memory for tpu_custom_call.1']
    #allocation14 [shape = 'u8[16384]{0}', space=vmem, size = 0x4000, scoped, tag = 'input window, operand 4, single buffered']
    #allocation15 [shape = 'u8[8192]{0}', space=vmem, size = 0x2000, scoped, tag = 'output window, operand 0']
    %11 = vsyncpa [#allocation7], 0
    %s12 = scalar_lea.sflag [#allocation7], 1
    %13 = vsyncpa %s12, 0
    %14 = vsyncpa [#allocation10], 0
    %15 = vsyncpa [#allocation13], 0
    %16 = vsyncpa [#allocation8], 0
    %s17 = scalar_lea.sflag [#allocation8], 1
    %18 = vsyncpa %s17, 0
    loop: start=0, step=1, limit=4
    $region2: #{tpu_custom_call.1} parent=1 // loop_pre_header
      _
    $region3: #{tpu_custom_call.1} parent=1 // loop_header
      %s20 = sphi 0, %s24
      %p21 = scmp.ge.s32.totalorder %s20, 4
      %s27 = sphi 0, %s39
      %s28 = sphi 0, %s35
      %s29 = sphi 0, %s27
      %s30 = sphi 0, %s28
      %s31 = sphi 0, %s29
      %s32 = sphi 0, %s30
      %s42 = sphi 0, %s44
      %s45 = sphi 0, %s42
      %s46 = sphi 0, %s45
      %s62 = sphi 0, %s46
      %s66 = sphi 0, %s66
      %s68 = sphi 0, %s66
      %s69 = sphi 0, %s68
      %s83 = sphi 0, %s69
      %s87 = sphi 0, %s87
      %s89 = sphi 0, %s87
      %s90 = sphi 0, %s89
      %s104 = sphi 0, %s90
      %s108 = sphi 0, %s108
      %s110 = sphi 0, %s108
      %s111 = sphi 0, %s110
      %s125 = sphi 0, %s111
      %s129 = sphi 0, %s129
      %s131 = sphi 0, %s129
      %s132 = sphi 0, %s131
      %s146 = sphi 0, %s132
      %s150 = sphi 0, %s150
      %s152 = sphi 0, %s150
      %s153 = sphi 0, %s152
      %s167 = sphi 0, %s153
      %s175 = sphi 0, %s177
      %s178 = sphi 0, %s175
      %s179 = sphi 0, %s178
      %s195 = sphi 0, %s179
    $region4: #{tpu_custom_call.1} parent=1 // loop_header_branch
      %23 = sbr.rel (%p21) target = $region8
    $region5: #{tpu_custom_call.1} parent=1 // loop_body
      %s25 = ssub.s32 %s20, 1
      %s26 = ssub.s32 %s20, 2
      %s33 = sadd.s32 1, %s28
      %p34 = scmp.ge.s32.totalorder %s33, 1
      %s35 = scalar_select %p34, 0, %s33
      %s36 = sadd.s32 1, %s27
      %s37 = scalar_select %p34, %s36, %s27
      %p38 = scmp.ge.s32.totalorder %s37, 2
      %s39 = scalar_select %p38, 0, %s37
      %s40 = ssub.s32 %s27, %s39
      %p41 = scmp.eq.s32.totalorder %s40, 0
      %s43 = sadd.s32 %s42, 1
      %s44 = scalar_select %p41, %s42, %s43
      %p47 = pneg %p41
      %p48 = scmp.eq.s32.totalorder %s20, 1
      %p49 = por %p47, %p48
      %p50 = scmp.ne.s32.totalorder %s42, %s45
      %p51 = scmp.eq.s32.totalorder %s20, 0
      %p52 = por %p50, %p51
      %p53 = scmp.ne.s32.totalorder %s42, %s45
      %p54 = scmp.eq.s32.totalorder %s25, 1
      %p55 = por %p53, %p54
      %p56 = scmp.ne.s32.totalorder %s45, %s46
      %p57 = scmp.eq.s32.totalorder %s25, 0
      %p58 = por %p56, %p57
      %p59 = scmp.ne.s32.totalorder %s45, %s46
      %p60 = scmp.eq.s32.totalorder %s26, 1
      %p61 = por %p59, %p60
      %p63 = scmp.ne.s32.totalorder %s46, %s62
      %p64 = scmp.eq.s32.totalorder %s26, 0
      %p65 = por %p63, %p64
      %s67 = sadd.s32 %s66, 1
      %p70 = scmp.eq.s32.totalorder %s20, 1
      %p71 = scmp.ne.s32.totalorder %s66, %s68
      %p72 = scmp.eq.s32.totalorder %s20, 0
      %p73 = por %p71, %p72
      %p74 = scmp.ne.s32.totalorder %s66, %s68
      %p75 = scmp.eq.s32.totalorder %s25, 1
      %p76 = por %p74, %p75
      %p77 = scmp.ne.s32.totalorder %s68, %s69
      %p78 = scmp.eq.s32.totalorder %s25, 0
      %p79 = por %p77, %p78
      %p80 = scmp.ne.s32.totalorder %s68, %s69
      %p81 = scmp.eq.s32.totalorder %s26, 1
      %p82 = por %p80, %p81
      %p84 = scmp.ne.s32.totalorder %s69, %s83
      %p85 = scmp.eq.s32.totalorder %s26, 0
      %p86 = por %p84, %p85
      %s88 = sadd.s32 %s87, 1
      %p91 = scmp.eq.s32.totalorder %s20, 1
      %p92 = scmp.ne.s32.totalorder %s87, %s89
      %p93 = scmp.eq.s32.totalorder %s20, 0
      %p94 = por %p92, %p93
      %p95 = scmp.ne.s32.totalorder %s87, %s89
      %p96 = scmp.eq.s32.totalorder %s25, 1
      %p97 = por %p95, %p96
      %p98 = scmp.ne.s32.totalorder %s89, %s90
      %p99 = scmp.eq.s32.totalorder %s25, 0
      %p100 = por %p98, %p99
      %p101 = scmp.ne.s32.totalorder %s89, %s90
      %p102 = scmp.eq.s32.totalorder %s26, 1
      %p103 = por %p101, %p102
      %p105 = scmp.ne.s32.totalorder %s90, %s104
      %p106 = scmp.eq.s32.totalorder %s26, 0
      %p107 = por %p105, %p106
      %s109 = sadd.s32 %s108, 1
      %p112 = scmp.eq.s32.totalorder %s20, 1
      %p113 = scmp.ne.s32.totalorder %s108, %s110
      %p114 = scmp.eq.s32.totalorder %s20, 0
      %p115 = por %p113, %p114
      %p116 = scmp.ne.s32.totalorder %s108, %s110
      %p117 = scmp.eq.s32.totalorder %s25, 1
      %p118 = por %p116, %p117
      %p119 = scmp.ne.s32.totalorder %s110, %s111
      %p120 = scmp.eq.s32.totalorder %s25, 0
      %p121 = por %p119, %p120
      %p122 = scmp.ne.s32.totalorder %s110, %s111
      %p123 = scmp.eq.s32.totalorder %s26, 1
      %p124 = por %p122, %p123
      %p126 = scmp.ne.s32.totalorder %s111, %s125
      %p127 = scmp.eq.s32.totalorder %s26, 0
      %p128 = por %p126, %p127
      %s130 = sadd.s32 %s129, 1
      %p133 = scmp.eq.s32.totalorder %s20, 1
      %p134 = scmp.ne.s32.totalorder %s129, %s131
      %p135 = scmp.eq.s32.totalorder %s20, 0
      %p136 = por %p134, %p135
      %p137 = scmp.ne.s32.totalorder %s129, %s131
      %p138 = scmp.eq.s32.totalorder %s25, 1
      %p139 = por %p137, %p138
      %p140 = scmp.ne.s32.totalorder %s131, %s132
      %p141 = scmp.eq.s32.totalorder %s25, 0
      %p142 = por %p140, %p141
      %p143 = scmp.ne.s32.totalorder %s131, %s132
      %p144 = scmp.eq.s32.totalorder %s26, 1
      %p145 = por %p143, %p144
      %p147 = scmp.ne.s32.totalorder %s132, %s146
      %p148 = scmp.eq.s32.totalorder %s26, 0
      %p149 = por %p147, %p148
      %s151 = sadd.s32 %s150, 1
      %p154 = scmp.eq.s32.totalorder %s20, 1
      %p155 = scmp.ne.s32.totalorder %s150, %s152
      %p156 = scmp.eq.s32.totalorder %s20, 0
      %p157 = por %p155, %p156
      %p158 = scmp.ne.s32.totalorder %s150, %s152
      %p159 = scmp.eq.s32.totalorder %s25, 1
      %p160 = por %p158, %p159
      %p161 = scmp.ne.s32.totalorder %s152, %s153
      %p162 = scmp.eq.s32.totalorder %s25, 0
      %p163 = por %p161, %p162
      %p164 = scmp.ne.s32.totalorder %s152, %s153
      %p165 = scmp.eq.s32.totalorder %s26, 1
      %p166 = por %p164, %p165
      %p168 = scmp.ne.s32.totalorder %s153, %s167
      %p169 = scmp.eq.s32.totalorder %s26, 0
      %p170 = por %p168, %p169
      %s171 = ssub.s32 %s27, %s39
      %s172 = ssub.s32 %s28, %s35
      %s173 = sor.u32 %s171, %s172
      %p174 = scmp.eq.s32.totalorder %s173, 0
      %s176 = sadd.s32 %s175, 1
      %s177 = scalar_select %p174, %s175, %s176
      %p180 = pneg %p174
      %p181 = scmp.eq.s32.totalorder %s20, 1
      %p182 = por %p180, %p181
      %p183 = scmp.ne.s32.totalorder %s175, %s178
      %p184 = scmp.eq.s32.totalorder %s20, 0
      %p185 = por %p183, %p184
      %p186 = scmp.ne.s32.totalorder %s175, %s178
      %p187 = scmp.eq.s32.totalorder %s25, 1
      %p188 = por %p186, %p187
      %p189 = scmp.ne.s32.totalorder %s178, %s179
      %p190 = scmp.eq.s32.totalorder %s25, 0
      %p191 = por %p189, %p190
      %p192 = scmp.ne.s32.totalorder %s178, %s179
      %p193 = scmp.eq.s32.totalorder %s26, 1
      %p194 = por %p192, %p193
      %p196 = scmp.ne.s32.totalorder %s179, %s195
      %p197 = scmp.eq.s32.totalorder %s26, 0
      %p198 = por %p196, %p197
      %p199 = scmp.le.s32.totalorder 1, %s20
      %p200 = scmp.lt.s32.totalorder %s20, 3
      %p201 = pnand %p199, %p200
      %p202 = pneg %p201
      // Predicated region
      $region9: #{tpu_custom_call.1} parent=5 // pred_check
        _
      $region10: #{tpu_custom_call.1} parent=5 // pred_check_branch
        %204 = sbr.rel (%p201) target = $region12
      $region11: #{tpu_custom_call.1} parent=5 // pred_region
        %s205 = ssub.s32 %s20, 1
        // Predicated region
        $region13: #{tpu_custom_call.1} parent=11 // pred_check
          %p206 = pneg %p79
        $region14: #{tpu_custom_call.1} parent=11 // pred_check_branch
          %208 = sbr.rel (%p206) target = $region16
        $region15: #{tpu_custom_call.1} parent=11 // pred_region
          %s210 = ssub.s32 512, 512
          %211 = vsyncadd [#allocation10], %s210
          %s212 = sshll.u32 [#allocation9], 4
          %s213 = int_to_ptr.vmem [resolvable:$true] %s212
          %218 = dma.hbm_to_vmem [thread:$0]  %s1, 512, %s213, [#allocation10], 128, 128, 8
        $region16: #{tpu_custom_call.1} parent=11 // pred_fallthru
          _
        // Predicated region
        $region17: #{tpu_custom_call.1} parent=11 // pred_check
          %p219 = pneg %p100
        $region18: #{tpu_custom_call.1} parent=11 // pred_check_branch
          %221 = sbr.rel (%p219) target = $region20
        $region19: #{tpu_custom_call.1} parent=11 // pred_region
          %s223 = ssub.s32 512, 512
          %224 = vsyncadd [#allocation10], %s223
          %s225 = sshll.u32 [#allocation11], 4
          %s226 = int_to_ptr.vmem [resolvable:$true] %s225
          %231 = dma.hbm_to_vmem [thread:$0]  %s2, 512, %s226, [#allocation10], 128, 128, 8
        $region20: #{tpu_custom_call.1} parent=11 // pred_fallthru
          _
        // Predicated region
        $region21: #{tpu_custom_call.1} parent=11 // pred_check
          %p232 = pneg %p121
        $region22: #{tpu_custom_call.1} parent=11 // pred_check_branch
          %234 = sbr.rel (%p232) target = $region24
        $region23: #{tpu_custom_call.1} parent=11 // pred_region
          %s236 = ssub.s32 512, 512
          %237 = vsyncadd [#allocation13], %s236
          %s238 = sshll.u32 [#allocation12], 4
          %s239 = int_to_ptr.vmem [resolvable:$true] %s238
          %244 = dma.hbm_to_vmem [thread:$0]  %s3, 512, %s239, [#allocation13], 128, 128, 8
        $region24: #{tpu_custom_call.1} parent=11 // pred_fallthru
          _
        // Predicated region
        $region25: #{tpu_custom_call.1} parent=11 // pred_check
          %p245 = pneg %p142
        $region26: #{tpu_custom_call.1} parent=11 // pred_check_branch
          %247 = sbr.rel (%p245) target = $region28
        $region27: #{tpu_custom_call.1} parent=11 // pred_region
          %s249 = ssub.s32 512, 512
          %250 = vsyncadd [#allocation13], %s249
          %s251 = sshll.u32 [#allocation14], 4
          %s252 = int_to_ptr.vmem [resolvable:$true] %s251
          %257 = dma.hbm_to_vmem [thread:$0]  %s4, 512, %s252, [#allocation13], 128, 128, 8
        $region28: #{tpu_custom_call.1} parent=11 // pred_fallthru
          _
        // Predicated region
        $region29: #{tpu_custom_call.1} parent=11 // pred_check
          %p258 = pneg %p163
        $region30: #{tpu_custom_call.1} parent=11 // pred_check_branch
          %260 = sbr.rel (%p258) target = $region32
        $region31: #{tpu_custom_call.1} parent=11 // pred_region
          _
        $region32: #{tpu_custom_call.1} parent=11 // pred_fallthru
          _
      $region12: #{tpu_custom_call.1} parent=5 // pred_fallthru
        _
      %p261 = scmp.lt.s32.totalorder %s20, 2
      // Predicated region
      $region33: #{tpu_custom_call.1} parent=5 // pred_check
        %p262 = pneg %p261
      $region34: #{tpu_custom_call.1} parent=5 // pred_check_branch
        %264 = sbr.rel (%p262) target = $region36
      $region35: #{tpu_custom_call.1} parent=5 // pred_region
        // Predicated region
        $region37: #{tpu_custom_call.1} parent=35 // pred_check
          %p265 = pneg %p52
        $region38: #{tpu_custom_call.1} parent=35 // pred_check_branch
          %267 = sbr.rel (%p265) target = $region40
        $region39: #{tpu_custom_call.1} parent=35 // pred_region
          %s268 = sand.u32 %s42, 1
          %s269 = scalar_lea.sflag [#allocation7], %s268
          %s270 = sand.u32 %s42, 1
          %s271 = smul.addr %s270, 8
          %s272 = scalar_lea.vmem [#allocation6], %s271
          %s274 = ssub.s32 128, 128
          %275 = vsyncadd %s269, %s274
          %s276 = smul.addr %s27, 128
          %s277 = scalar_lea.hbm %s0, %s276
          %s279 = sshll.u32 %s272, 4
          %s280 = int_to_ptr.vmem [resolvable:$true] %s279
          %282 = dma.hbm_to_vmem [thread:$0]  %s277, 128, %s280, %s269
        $region40: #{tpu_custom_call.1} parent=35 // pred_fallthru
          _
      $region36: #{tpu_custom_call.1} parent=5 // pred_fallthru
        _
      %p283 = scmp.le.s32.totalorder 1, %s20
      %p284 = scmp.lt.s32.totalorder %s20, 3
      %p285 = pnand %p283, %p284
      %p286 = pneg %p285
      // Predicated region
      $region41: #{tpu_custom_call.1} parent=5 // pred_check
        _
      $region42: #{tpu_custom_call.1} parent=5 // pred_check_branch
        %288 = sbr.rel (%p285) target = $region44
      $region43: #{tpu_custom_call.1} parent=5 // pred_region
        %s289 = ssub.s32 %s20, 1
        %s290 = sand.u32 %s45, 1
        %s291 = scalar_lea.sflag [#allocation7], %s290
        %s292 = sand.u32 %s45, 1
        %s293 = smul.addr %s292, 8
        %s294 = scalar_lea.vmem [#allocation6], %s293
        // Predicated region
        $region45: #{tpu_custom_call.1} parent=43 // pred_check
          %p295 = pneg %p58
        $region46: #{tpu_custom_call.1} parent=43 // pred_check_branch
          %297 = sbr.rel (%p295) target = $region48
        $region47: #{tpu_custom_call.1} parent=43 // pred_region
          %298 = dma.done %s291, 128
        $region48: #{tpu_custom_call.1} parent=43 // pred_fallthru
          _
        // Predicated region
        $region49: #{tpu_custom_call.1} parent=43 // pred_check
          %p299 = pneg %p79
        $region50: #{tpu_custom_call.1} parent=43 // pred_check_branch
          %301 = sbr.rel (%p299) target = $region52
        $region51: #{tpu_custom_call.1} parent=43 // pred_region
          %302 = dma.done [#allocation10], 512
        $region52: #{tpu_custom_call.1} parent=43 // pred_fallthru
          _
        // Predicated region
        $region53: #{tpu_custom_call.1} parent=43 // pred_check
          %p303 = pneg %p100
        $region54: #{tpu_custom_call.1} parent=43 // pred_check_branch
          %305 = sbr.rel (%p303) target = $region56
        $region55: #{tpu_custom_call.1} parent=43 // pred_region
          %306 = dma.done [#allocation10], 512
        $region56: #{tpu_custom_call.1} parent=43 // pred_fallthru
          _
        // Predicated region
        $region57: #{tpu_custom_call.1} parent=43 // pred_check
          %p307 = pneg %p121
        $region58: #{tpu_custom_call.1} parent=43 // pred_check_branch
          %309 = sbr.rel (%p307) target = $region60
        $region59: #{tpu_custom_call.1} parent=43 // pred_region
          %310 = dma.done [#allocation13], 512
        $region60: #{tpu_custom_call.1} parent=43 // pred_fallthru
          _
        // Predicated region
        $region61: #{tpu_custom_call.1} parent=43 // pred_check
          %p311 = pneg %p142
        $region62: #{tpu_custom_call.1} parent=43 // pred_check_branch
          %313 = sbr.rel (%p311) target = $region64
        $region63: #{tpu_custom_call.1} parent=43 // pred_region
          %314 = dma.done [#allocation13], 512
        $region64: #{tpu_custom_call.1} parent=43 // pred_fallthru
          _
        %s315 = sand.u32 %s45, 1
        %s316 = scalar_lea.sflag [#allocation7], %s315
        %s317 = sand.u32 %s45, 1
        %s318 = smul.addr %s317, 8
        %s319 = scalar_lea.vmem [#allocation6], %s318
        %p320 = pneg %p58
        %p321 = pneg %p55
        %p322 = pneg %p79
        %p323 = pneg %p76
        %p324 = pneg %p100
        %p325 = pneg %p97
        %p326 = pneg %p121
        %p327 = pneg %p118
        %p328 = pneg %p142
        %p329 = pneg %p139
        %p330 = pneg %p163
        %p331 = pneg %p160
        %p332 = pneg %p191
        %p333 = pneg %p188
        %s334 = sand.u32 %s178, 1
        %s335 = scalar_lea.sflag [#allocation8], %s334
        %s336 = sand.u32 %s178, 1
        %s337 = smul.addr %s336, 8
        %s338 = scalar_lea.vmem [#allocation15], %s337
        %p339 = scmp.eq.s32.totalorder %s30, 0
        // Predicated region
        $region65: #{tpu_custom_call.1} parent=43 // pred_check
          %p340 = pneg %p339
        $region66: #{tpu_custom_call.1} parent=43 // pred_check_branch
          %342 = sbr.rel (%p340) target = $region68
        $region67: #{tpu_custom_call.1} parent=43 // pred_region
          %v343 = vld [vmem:[%s294] sm:$0xff]
          %v344 = vld [vmem:[#allocation11] sm:$0xff]
          %v345 = vld [vmem:[#allocation11 + $0x8] sm:$0xff]
          %v346 = vld [vmem:[#allocation11 + $0x10] sm:$0xff]
          %v347 = vld [vmem:[#allocation11 + $0x18] sm:$0xff]
          %vm348 = vcmask 261120
          %v350 = vsel %vm348, %v343, 0
          %352 = vmatprep.subr.mxu0 0.0
          %353 = vmatpush1.msra.mxu0 0.0
          %354 = vmatprep.subr.mxu0 0.0
          %355 = vmatpush1.msra.mxu0 0.0
          %356 = vmatprep.subr.mxu0 0.0
          %357 = vmatpush1.msra.mxu0 0.0
          %358 = vmatprep.subr.mxu0 0.0
          %359 = vmatpush1.msra.mxu0 0.0
          %360 = vmatprep.subr.mxu0 0.0
          %361 = vmatpush1.msra.mxu0 0.0
          %362 = vmatprep.subr.mxu0 0.0
          %363 = vmatpush1.msra.mxu0 0.0
          %364 = vmatprep.subr.mxu0 0.0
          %365 = vmatpush1.msra.mxu0 0.0
          %366 = vmatprep.subr.mxu0 0.0
          %367 = vmatpush1.msra.mxu0 0.0
          %368 = vmatprep.subr.mxu0 0.0
          %369 = vmatpush1.msra.mxu0 0.0
          %370 = vmatprep.subr.mxu0 0.0
          %371 = vmatpush1.msra.mxu0 0.0
          %372 = vmatprep.subr.mxu0 0.0
          %373 = vmatpush1.msra.mxu0 0.0
          %374 = vmatprep.subr.mxu0 0.0
          %375 = vmatpush1.msra.mxu0 0.0
          %376 = vmatprep.subr.mxu0 0.0
          %377 = vmatpush1.msra.mxu0 %v347
          %378 = vmatprep.subr.mxu0 0.0
          %379 = vmatpush1.msra.mxu0 %v346
          %380 = vmatprep.subr.mxu0 0.0
          %381 = vmatpush1.msra.mxu0 %v345
          %382 = vmatprep.subr.mxu0 0.0
          %383 = vmatpush1.msra.mxu0 %v344
          %384 = vmatprep.subr.mxu0 0.0
          %385 = vmatpush2.msra.mxu0 0.0
          %386 = vmatprep.subr.mxu0 0.0
          %387 = vmatpush2.msra.mxu0 0.0
          %388 = vmatprep.subr.mxu0 0.0
          %389 = vmatpush2.msra.mxu0 0.0
          %390 = vmatprep.subr.mxu0 0.0
          %391 = vmatpush2.msra.mxu0 0.0
          %392 = vmatprep.subr.mxu0 0.0
          %393 = vmatpush2.msra.mxu0 0.0
          %394 = vmatprep.subr.mxu0 0.0
          %395 = vmatpush2.msra.mxu0 0.0
          %396 = vmatprep.subr.mxu0 0.0
          %397 = vmatpush2.msra.mxu0 0.0
          %398 = vmatprep.subr.mxu0 0.0
          %399 = vmatpush2.msra.mxu0 0.0
          %400 = vmatprep.subr.mxu0 0.0
          %401 = vmatpush2.msra.mxu0 0.0
          %402 = vmatprep.subr.mxu0 0.0
          %403 = vmatpush2.msra.mxu0 0.0
          %404 = vmatprep.subr.mxu0 0.0
          %405 = vmatpush2.msra.mxu0 0.0
          %406 = vmatprep.subr.mxu0 0.0
          %407 = vmatpush2.msra.mxu0 0.0
          %408 = vmatprep.subr.mxu0 0.0
          %409 = vmatpush2.msra.mxu0 0.0
          %410 = vmatprep.subr.mxu0 0.0
          %411 = vmatpush2.msra.mxu0 0.0
          %412 = vmatprep.subr.mxu0 0.0
          %413 = vmatpush2.msra.mxu0 0.0
          %414 = vmatprep.subr.mxu0 0.0
          %415 = vmatpush2.msra.mxu0 0.0
          %416 = vmatprep.mubr.f32.mxu0 0.0
          %417 = vmatmul.mubr.f32.gmra.mxu0 %v350
          %v418 = vpop.f32.mrf.mxu0
          %v419 = vadd.f32 0.0, %v418
          %v420 = vpop.f32.mrf.mxu0
          %421 = vdwg.mxu0
          %422 = vst.msk [vmem:[#allocation3] sm:$0xff] %vm348, %v419
          %v423 = vld [vmem:[#allocation12] sm:$0xff]
          %v424 = vld [vmem:[#allocation12 + $0x8] sm:$0xff]
          %v425 = vld [vmem:[#allocation12 + $0x10] sm:$0xff]
          %v426 = vld [vmem:[#allocation12 + $0x18] sm:$0xff]
          %427 = vmatprep.subr.mxu0 0.0
          %428 = vmatpush1.msra.mxu0 0.0
          %429 = vmatprep.subr.mxu0 0.0
          %430 = vmatpush1.msra.mxu0 0.0
          %431 = vmatprep.subr.mxu0 0.0
          %432 = vmatpush1.msra.mxu0 0.0
          %433 = vmatprep.subr.mxu0 0.0
          %434 = vmatpush1.msra.mxu0 0.0
          %435 = vmatprep.subr.mxu0 0.0
          %436 = vmatpush1.msra.mxu0 0.0
          %437 = vmatprep.subr.mxu0 0.0
          %438 = vmatpush1.msra.mxu0 0.0
          %439 = vmatprep.subr.mxu0 0.0
          %440 = vmatpush1.msra.mxu0 0.0
          %441 = vmatprep.subr.mxu0 0.0
          %442 = vmatpush1.msra.mxu0 0.0
          %443 = vmatprep.subr.mxu0 0.0
          %444 = vmatpush1.msra.mxu0 0.0
          %445 = vmatprep.subr.mxu0 0.0
          %446 = vmatpush1.msra.mxu0 0.0
          %447 = vmatprep.subr.mxu0 0.0
          %448 = vmatpush1.msra.mxu0 0.0
          %449 = vmatprep.subr.mxu0 0.0
          %450 = vmatpush1.msra.mxu0 0.0
          %451 = vmatprep.subr.mxu0 0.0
          %452 = vmatpush1.msra.mxu0 %v426
          %453 = vmatprep.subr.mxu0 0.0
          %454 = vmatpush1.msra.mxu0 %v425
          %455 = vmatprep.subr.mxu0 0.0
          %456 = vmatpush1.msra.mxu0 %v424
          %457 = vmatprep.subr.mxu0 0.0
          %458 = vmatpush1.msra.mxu0 %v423
          %459 = vmatprep.subr.mxu0 0.0
          %460 = vmatpush2.msra.mxu0 0.0
          %461 = vmatprep.subr.mxu0 0.0
          %462 = vmatpush2.msra.mxu0 0.0
          %463 = vmatprep.subr.mxu0 0.0
          %464 = vmatpush2.msra.mxu0 0.0
          %465 = vmatprep.subr.mxu0 0.0
          %466 = vmatpush2.msra.mxu0 0.0
          %467 = vmatprep.subr.mxu0 0.0
          %468 = vmatpush2.msra.mxu0 0.0
          %469 = vmatprep.subr.mxu0 0.0
          %470 = vmatpush2.msra.mxu0 0.0
          %471 = vmatprep.subr.mxu0 0.0
          %472 = vmatpush2.msra.mxu0 0.0
          %473 = vmatprep.subr.mxu0 0.0
          %474 = vmatpush2.msra.mxu0 0.0
          %475 = vmatprep.subr.mxu0 0.0
          %476 = vmatpush2.msra.mxu0 0.0
          %477 = vmatprep.subr.mxu0 0.0
          %478 = vmatpush2.msra.mxu0 0.0
          %479 = vmatprep.subr.mxu0 0.0
          %480 = vmatpush2.msra.mxu0 0.0
          %481 = vmatprep.subr.mxu0 0.0
          %482 = vmatpush2.msra.mxu0 0.0
          %483 = vmatprep.subr.mxu0 0.0
          %484 = vmatpush2.msra.mxu0 0.0
          %485 = vmatprep.subr.mxu0 0.0
          %486 = vmatpush2.msra.mxu0 0.0
          %487 = vmatprep.subr.mxu0 0.0
          %488 = vmatpush2.msra.mxu0 0.0
          %489 = vmatprep.subr.mxu0 0.0
          %490 = vmatpush2.msra.mxu0 0.0
          %491 = vmatprep.mubr.f32.mxu0 0.0
          %492 = vmatmul.mubr.f32.gmra.mxu0 %v350
          %v493 = vpop.f32.mrf.mxu0
          %v494 = vadd.f32 0.0, %v493
          %v495 = vpop.f32.mrf.mxu0
          %496 = vdwg.mxu0
          %497 = vst.msk [vmem:[#allocation4] sm:$0xff] %vm348, %v494
          %v498 = vld [vmem:[#allocation9] sm:$0xff]
          %v499 = vld [vmem:[#allocation9 + $0x8] sm:$0xff]
          %v500 = vld [vmem:[#allocation9 + $0x10] sm:$0xff]
          %v501 = vld [vmem:[#allocation9 + $0x18] sm:$0xff]
          %502 = vmatprep.subr.mxu0 0.0
          %503 = vmatpush1.msra.mxu0 0.0
          %504 = vmatprep.subr.mxu0 0.0
          %505 = vmatpush1.msra.mxu0 0.0
          %506 = vmatprep.subr.mxu0 0.0
          %507 = vmatpush1.msra.mxu0 0.0
          %508 = vmatprep.subr.mxu0 0.0
          %509 = vmatpush1.msra.mxu0 0.0
          %510 = vmatprep.subr.mxu0 0.0
          %511 = vmatpush1.msra.mxu0 0.0
          %512 = vmatprep.subr.mxu0 0.0
          %513 = vmatpush1.msra.mxu0 0.0
          %514 = vmatprep.subr.mxu0 0.0
          %515 = vmatpush1.msra.mxu0 0.0
          %516 = vmatprep.subr.mxu0 0.0
          %517 = vmatpush1.msra.mxu0 0.0
          %518 = vmatprep.subr.mxu0 0.0
          %519 = vmatpush1.msra.mxu0 0.0
          %520 = vmatprep.subr.mxu0 0.0
          %521 = vmatpush1.msra.mxu0 0.0
          %522 = vmatprep.subr.mxu0 0.0
          %523 = vmatpush1.msra.mxu0 0.0
          %524 = vmatprep.subr.mxu0 0.0
          %525 = vmatpush1.msra.mxu0 0.0
          %526 = vmatprep.subr.mxu0 0.0
          %527 = vmatpush1.msra.mxu0 %v501
          %528 = vmatprep.subr.mxu0 0.0
          %529 = vmatpush1.msra.mxu0 %v500
          %530 = vmatprep.subr.mxu0 0.0
          %531 = vmatpush1.msra.mxu0 %v499
          %532 = vmatprep.subr.mxu0 0.0
          %533 = vmatpush1.msra.mxu0 %v498
          %534 = vmatprep.subr.mxu0 0.0
          %535 = vmatpush2.msra.mxu0 0.0
          %536 = vmatprep.subr.mxu0 0.0
          %537 = vmatpush2.msra.mxu0 0.0
          %538 = vmatprep.subr.mxu0 0.0
          %539 = vmatpush2.msra.mxu0 0.0
          %540 = vmatprep.subr.mxu0 0.0
          %541 = vmatpush2.msra.mxu0 0.0
          %542 = vmatprep.subr.mxu0 0.0
          %543 = vmatpush2.msra.mxu0 0.0
          %544 = vmatprep.subr.mxu0 0.0
          %545 = vmatpush2.msra.mxu0 0.0
          %546 = vmatprep.subr.mxu0 0.0
          %547 = vmatpush2.msra.mxu0 0.0
          %548 = vmatprep.subr.mxu0 0.0
          %549 = vmatpush2.msra.mxu0 0.0
          %550 = vmatprep.subr.mxu0 0.0
          %551 = vmatpush2.msra.mxu0 0.0
          %552 = vmatprep.subr.mxu0 0.0
          %553 = vmatpush2.msra.mxu0 0.0
          %554 = vmatprep.subr.mxu0 0.0
          %555 = vmatpush2.msra.mxu0 0.0
          %556 = vmatprep.subr.mxu0 0.0
          %557 = vmatpush2.msra.mxu0 0.0
          %558 = vmatprep.subr.mxu0 0.0
          %559 = vmatpush2.msra.mxu0 0.0
          %560 = vmatprep.subr.mxu0 0.0
          %561 = vmatpush2.msra.mxu0 0.0
          %562 = vmatprep.subr.mxu0 0.0
          %563 = vmatpush2.msra.mxu0 0.0
          %564 = vmatprep.subr.mxu0 0.0
          %565 = vmatpush2.msra.mxu0 0.0
          %566 = vmatprep.mubr.f32.mxu0 0.0
          %567 = vmatmul.mubr.f32.gmra.mxu0 %v350
          %v568 = vpop.f32.mrf.mxu0
          %v569 = vadd.f32 0.0, %v568
          %v570 = vpop.f32.mrf.mxu0
          %571 = vdwg.mxu0
          %572 = vst.msk [vmem:[#allocation2] sm:$0xff] %vm348, %v569
        $region68: #{tpu_custom_call.1} parent=43 // pred_fallthru
          _
        %s573 = smul.u32 %s30, 8
        %s574 = scalar_lea.vmem [#allocation2], %s573
        %v575 = vld [vmem:[%s574] sm:$0xff]
        %v576 = vld [vmem:[#allocation3] sm:$0xff]
        %v577 = vld [vmem:[#allocation4] sm:$0xff]
        %v578 = vlaneseq
        %v579 = vshrl.u32 %v578, 7
        %v580 = vstv %s573
        %v581 = vadd.s32 %v580, %v579
        %v582 = vlaneseq
        %v583 = vand.u32 %v582, 127
        %vm584 = vcmp.le.s32.totalorder %v583, %v581
        %v585 = vsel %vm584, 0.0, -1e+30
        %vm586 = vcmask 64512
        %v588 = vsel %vm586, %v575, 0
        %v591 = vsel %vm586, %v576, 0
        %593 = vmatprep.subr.mxu0 0.0
        %594 = vmatpush1.xpose.msra.mxu0 0.0
        %595 = vmatprep.subr.mxu0 0.0
        %596 = vmatpush1.xpose.msra.mxu0 0.0
        %597 = vmatprep.subr.mxu0 0.0
        %598 = vmatpush1.xpose.msra.mxu0 0.0
        %599 = vmatprep.subr.mxu0 0.0
        %600 = vmatpush1.xpose.msra.mxu0 0.0
        %601 = vmatprep.subr.mxu0 0.0
        %602 = vmatpush1.xpose.msra.mxu0 0.0
        %603 = vmatprep.subr.mxu0 0.0
        %604 = vmatpush1.xpose.msra.mxu0 0.0
        %605 = vmatprep.subr.mxu0 0.0
        %606 = vmatpush1.xpose.msra.mxu0 0.0
        %607 = vmatprep.subr.mxu0 0.0
        %608 = vmatpush1.xpose.msra.mxu0 0.0
        %609 = vmatprep.subr.mxu0 0.0
        %610 = vmatpush1.xpose.msra.mxu0 0.0
        %611 = vmatprep.subr.mxu0 0.0
        %612 = vmatpush1.xpose.msra.mxu0 0.0
        %613 = vmatprep.subr.mxu0 0.0
        %614 = vmatpush1.xpose.msra.mxu0 0.0
        %615 = vmatprep.subr.mxu0 0.0
        %616 = vmatpush1.xpose.msra.mxu0 0.0
        %617 = vmatprep.subr.mxu0 0.0
        %618 = vmatpush1.xpose.msra.mxu0 0.0
        %619 = vmatprep.subr.mxu0 0.0
        %620 = vmatpush1.xpose.msra.mxu0 0.0
        %621 = vmatprep.subr.mxu0 0.0
        %622 = vmatpush1.xpose.msra.mxu0 0.0
        %623 = vmatprep.subr.mxu0 0.0
        %624 = vmatpush1.xpose.msra.mxu0 %v591
        %625 = vmatprep.subr.mxu0 0.0
        %626 = vmatpush2.xpose.msra.mxu0 0.0
        %627 = vmatprep.subr.mxu0 0.0
        %628 = vmatpush2.xpose.msra.mxu0 0.0
        %629 = vmatprep.subr.mxu0 0.0
        %630 = vmatpush2.xpose.msra.mxu0 0.0
        %631 = vmatprep.subr.mxu0 0.0
        %632 = vmatpush2.xpose.msra.mxu0 0.0
        %633 = vmatprep.subr.mxu0 0.0
        %634 = vmatpush2.xpose.msra.mxu0 0.0
        %635 = vmatprep.subr.mxu0 0.0
        %636 = vmatpush2.xpose.msra.mxu0 0.0
        %637 = vmatprep.subr.mxu0 0.0
        %638 = vmatpush2.xpose.msra.mxu0 0.0
        %639 = vmatprep.subr.mxu0 0.0
        %640 = vmatpush2.xpose.msra.mxu0 0.0
        %641 = vmatprep.subr.mxu0 0.0
        %642 = vmatpush2.xpose.msra.mxu0 0.0
        %643 = vmatprep.subr.mxu0 0.0
        %644 = vmatpush2.xpose.msra.mxu0 0.0
        %645 = vmatprep.subr.mxu0 0.0
        %646 = vmatpush2.xpose.msra.mxu0 0.0
        %647 = vmatprep.subr.mxu0 0.0
        %648 = vmatpush2.xpose.msra.mxu0 0.0
        %649 = vmatprep.subr.mxu0 0.0
        %650 = vmatpush2.xpose.msra.mxu0 0.0
        %651 = vmatprep.subr.mxu0 0.0
        %652 = vmatpush2.xpose.msra.mxu0 0.0
        %653 = vmatprep.subr.mxu0 0.0
        %654 = vmatpush2.xpose.msra.mxu0 0.0
        %655 = vmatprep.subr.mxu0 0.0
        %656 = vmatpush2.xpose.msra.mxu0 0.0
        %657 = vmatprep.mubr.f32.mxu0 0.0
        %658 = vmatmul.mubr.f32.gmra.mxu0 %v588
        %v659 = vpop.f32.mrf.mxu0
        %v660 = vadd.f32 %v585, %v659
        %v661 = vpop.f32.mrf.mxu0
        %662 = vdwg.mxu0
        %v663 = vsel %vm586, %v660, -inf
        %664 = vmax.xlane.f32.xlu0 %v663
        %v665 = vpop.xlane.xlu0 %664
        %v666 = vsub.f32 %v660, %v665
        %v667 = vmul.f32 %v666, 1.442695
        %v668 = vpow.pop %v667
        %v669 = vsel %vm586, %v668, 0.0
        %670 = vadd.xlane.f32.xlu0 %v669
        %v671 = vpop.xlane.xlu0 %670
        %v673 = vsel %vm586, %v668, 0
        %675 = vmatprep.subr.mxu0 0.0
        %676 = vmatpush1.msra.mxu0 0.0
        %677 = vmatprep.subr.mxu0 0.0
        %678 = vmatpush1.msra.mxu0 0.0
        %679 = vmatprep.subr.mxu0 0.0
        %680 = vmatpush1.msra.mxu0 0.0
        %681 = vmatprep.subr.mxu0 0.0
        %682 = vmatpush1.msra.mxu0 0.0
        %683 = vmatprep.subr.mxu0 0.0
        %684 = vmatpush1.msra.mxu0 0.0
        %685 = vmatprep.subr.mxu0 0.0
        %686 = vmatpush1.msra.mxu0 0.0
        %687 = vmatprep.subr.mxu0 0.0
        %688 = vmatpush1.msra.mxu0 0.0
        %689 = vmatprep.subr.mxu0 0.0
        %690 = vmatpush1.msra.mxu0 0.0
        %691 = vmatprep.subr.mxu0 0.0
        %692 = vmatpush1.msra.mxu0 0.0
        %693 = vmatprep.subr.mxu0 0.0
        %694 = vmatpush1.msra.mxu0 0.0
        %695 = vmatprep.subr.mxu0 0.0
        %696 = vmatpush1.msra.mxu0 0.0
        %697 = vmatprep.subr.mxu0 0.0
        %698 = vmatpush1.msra.mxu0 0.0
        %699 = vmatprep.subr.mxu0 0.0
        %700 = vmatpush1.msra.mxu0 0.0
        %701 = vmatprep.subr.mxu0 0.0
        %702 = vmatpush1.msra.mxu0 0.0
        %703 = vmatprep.subr.mxu0 0.0
        %704 = vmatpush1.msra.mxu0 0.0
        %705 = vmatprep.subr.mxu0 0.0
        %706 = vmatpush1.msra.mxu0 %v577
        %707 = vmatprep.subr.mxu0 0.0
        %708 = vmatpush2.msra.mxu0 0.0
        %709 = vmatprep.subr.mxu0 0.0
        %710 = vmatpush2.msra.mxu0 0.0
        %711 = vmatprep.subr.mxu0 0.0
        %712 = vmatpush2.msra.mxu0 0.0
        %713 = vmatprep.subr.mxu0 0.0
        %714 = vmatpush2.msra.mxu0 0.0
        %715 = vmatprep.subr.mxu0 0.0
        %716 = vmatpush2.msra.mxu0 0.0
        %717 = vmatprep.subr.mxu0 0.0
        %718 = vmatpush2.msra.mxu0 0.0
        %719 = vmatprep.subr.mxu0 0.0
        %720 = vmatpush2.msra.mxu0 0.0
        %721 = vmatprep.subr.mxu0 0.0
        %722 = vmatpush2.msra.mxu0 0.0
        %723 = vmatprep.subr.mxu0 0.0
        %724 = vmatpush2.msra.mxu0 0.0
        %725 = vmatprep.subr.mxu0 0.0
        %726 = vmatpush2.msra.mxu0 0.0
        %727 = vmatprep.subr.mxu0 0.0
        %728 = vmatpush2.msra.mxu0 0.0
        %729 = vmatprep.subr.mxu0 0.0
        %730 = vmatpush2.msra.mxu0 0.0
        %731 = vmatprep.subr.mxu0 0.0
        %732 = vmatpush2.msra.mxu0 0.0
        %733 = vmatprep.subr.mxu0 0.0
        %734 = vmatpush2.msra.mxu0 0.0
        %735 = vmatprep.subr.mxu0 0.0
        %736 = vmatpush2.msra.mxu0 0.0
        %737 = vmatprep.subr.mxu0 0.0
        %738 = vmatpush2.msra.mxu0 0.0
        %739 = vmatprep.mubr.f32.mxu0 0.0
        %740 = vmatmul.mubr.f32.gmra.mxu0 %v673
        %v741 = vpop.f32.mrf.mxu0
        %v742 = vadd.f32 0.0, %v741
        %v743 = vpop.f32.mrf.mxu0
        %744 = vdwg.mxu0
        %v745 = vrcp.pop %v671
        %v746 = vmul.f32 1.0, %v745
        %v747 = vmul.f32 %v742, %v746
        %748 = vst.msk [vmem:[#allocation5] sm:$0xff] %vm586, %v747
        %749 = vrot.lane.b32.xlu0 %v575, 120
        %v750 = vpop.permute.xlu0 %749
        %751 = vrot.lane.b32.xlu0 %v576, 120
        %v752 = vpop.permute.xlu0 %751
        %v753 = vsel %vm586, %v750, 0
        %v755 = vsel %vm586, %v752, 0
        %757 = vmatprep.subr.mxu0 0.0
        %758 = vmatpush1.xpose.msra.mxu0 0.0
        %759 = vmatprep.subr.mxu0 0.0
        %760 = vmatpush1.xpose.msra.mxu0 0.0
        %761 = vmatprep.subr.mxu0 0.0
        %762 = vmatpush1.xpose.msra.mxu0 0.0
        %763 = vmatprep.subr.mxu0 0.0
        %764 = vmatpush1.xpose.msra.mxu0 0.0
        %765 = vmatprep.subr.mxu0 0.0
        %766 = vmatpush1.xpose.msra.mxu0 0.0
        %767 = vmatprep.subr.mxu0 0.0
        %768 = vmatpush1.xpose.msra.mxu0 0.0
        %769 = vmatprep.subr.mxu0 0.0
        %770 = vmatpush1.xpose.msra.mxu0 0.0
        %771 = vmatprep.subr.mxu0 0.0
        %772 = vmatpush1.xpose.msra.mxu0 0.0
        %773 = vmatprep.subr.mxu0 0.0
        %774 = vmatpush1.xpose.msra.mxu0 0.0
        %775 = vmatprep.subr.mxu0 0.0
        %776 = vmatpush1.xpose.msra.mxu0 0.0
        %777 = vmatprep.subr.mxu0 0.0
        %778 = vmatpush1.xpose.msra.mxu0 0.0
        %779 = vmatprep.subr.mxu0 0.0
        %780 = vmatpush1.xpose.msra.mxu0 0.0
        %781 = vmatprep.subr.mxu0 0.0
        %782 = vmatpush1.xpose.msra.mxu0 0.0
        %783 = vmatprep.subr.mxu0 0.0
        %784 = vmatpush1.xpose.msra.mxu0 0.0
        %785 = vmatprep.subr.mxu0 0.0
        %786 = vmatpush1.xpose.msra.mxu0 0.0
        %787 = vmatprep.subr.mxu0 0.0
        %788 = vmatpush1.xpose.msra.mxu0 %v755
        %789 = vmatprep.subr.mxu0 0.0
        %790 = vmatpush2.xpose.msra.mxu0 0.0
        %791 = vmatprep.subr.mxu0 0.0
        %792 = vmatpush2.xpose.msra.mxu0 0.0
        %793 = vmatprep.subr.mxu0 0.0
        %794 = vmatpush2.xpose.msra.mxu0 0.0
        %795 = vmatprep.subr.mxu0 0.0
        %796 = vmatpush2.xpose.msra.mxu0 0.0
        %797 = vmatprep.subr.mxu0 0.0
        %798 = vmatpush2.xpose.msra.mxu0 0.0
        %799 = vmatprep.subr.mxu0 0.0
        %800 = vmatpush2.xpose.msra.mxu0 0.0
        %801 = vmatprep.subr.mxu0 0.0
        %802 = vmatpush2.xpose.msra.mxu0 0.0
        %803 = vmatprep.subr.mxu0 0.0
        %804 = vmatpush2.xpose.msra.mxu0 0.0
        %805 = vmatprep.subr.mxu0 0.0
        %806 = vmatpush2.xpose.msra.mxu0 0.0
        %807 = vmatprep.subr.mxu0 0.0
        %808 = vmatpush2.xpose.msra.mxu0 0.0
        %809 = vmatprep.subr.mxu0 0.0
        %810 = vmatpush2.xpose.msra.mxu0 0.0
        %811 = vmatprep.subr.mxu0 0.0
        %812 = vmatpush2.xpose.msra.mxu0 0.0
        %813 = vmatprep.subr.mxu0 0.0
        %814 = vmatpush2.xpose.msra.mxu0 0.0
        %815 = vmatprep.subr.mxu0 0.0
        %816 = vmatpush2.xpose.msra.mxu0 0.0
        %817 = vmatprep.subr.mxu0 0.0
        %818 = vmatpush2.xpose.msra.mxu0 0.0
        %819 = vmatprep.subr.mxu0 0.0
        %820 = vmatpush2.xpose.msra.mxu0 0.0
        %821 = vmatprep.mubr.f32.mxu0 0.0
        %822 = vmatmul.mubr.f32.gmra.mxu0 %v753
        %v823 = vpop.f32.mrf.mxu0
        %v824 = vadd.f32 %v585, %v823
        %v825 = vpop.f32.mrf.mxu0
        %826 = vdwg.mxu0
        %v827 = vsel %vm586, %v824, -inf
        %828 = vmax.xlane.f32.xlu0 %v827
        %v829 = vpop.xlane.xlu0 %828
        %v830 = vsub.f32 %v824, %v829
        %v831 = vmul.f32 %v830, 1.442695
        %v832 = vpow.pop %v831
        %v833 = vsel %vm586, %v832, 0.0
        %834 = vadd.xlane.f32.xlu0 %v833
        %v835 = vpop.xlane.xlu0 %834
        %837 = vrot.lane.b32.xlu0 %v577, 120
        %v838 = vpop.permute.xlu0 %837
        %v841 = vsel %vm586, %v832, 0
        %843 = vmatprep.subr.mxu0 0.0
        %844 = vmatpush1.msra.mxu0 0.0
        %845 = vmatprep.subr.mxu0 0.0
        %846 = vmatpush1.msra.mxu0 0.0
        %847 = vmatprep.subr.mxu0 0.0
        %848 = vmatpush1.msra.mxu0 0.0
        %849 = vmatprep.subr.mxu0 0.0
        %850 = vmatpush1.msra.mxu0 0.0
        %851 = vmatprep.subr.mxu0 0.0
        %852 = vmatpush1.msra.mxu0 0.0
        %853 = vmatprep.subr.mxu0 0.0
        %854 = vmatpush1.msra.mxu0 0.0
        %855 = vmatprep.subr.mxu0 0.0
        %856 = vmatpush1.msra.mxu0 0.0
        %857 = vmatprep.subr.mxu0 0.0
        %858 = vmatpush1.msra.mxu0 0.0
        %859 = vmatprep.subr.mxu0 0.0
        %860 = vmatpush1.msra.mxu0 0.0
        %861 = vmatprep.subr.mxu0 0.0
        %862 = vmatpush1.msra.mxu0 0.0
        %863 = vmatprep.subr.mxu0 0.0
        %864 = vmatpush1.msra.mxu0 0.0
        %865 = vmatprep.subr.mxu0 0.0
        %866 = vmatpush1.msra.mxu0 0.0
        %867 = vmatprep.subr.mxu0 0.0
        %868 = vmatpush1.msra.mxu0 0.0
        %869 = vmatprep.subr.mxu0 0.0
        %870 = vmatpush1.msra.mxu0 0.0
        %871 = vmatprep.subr.mxu0 0.0
        %872 = vmatpush1.msra.mxu0 0.0
        %873 = vmatprep.subr.mxu0 0.0
        %874 = vmatpush1.msra.mxu0 %v838
        %875 = vmatprep.subr.mxu0 0.0
        %876 = vmatpush2.msra.mxu0 0.0
        %877 = vmatprep.subr.mxu0 0.0
        %878 = vmatpush2.msra.mxu0 0.0
        %879 = vmatprep.subr.mxu0 0.0
        %880 = vmatpush2.msra.mxu0 0.0
        %881 = vmatprep.subr.mxu0 0.0
        %882 = vmatpush2.msra.mxu0 0.0
        %883 = vmatprep.subr.mxu0 0.0
        %884 = vmatpush2.msra.mxu0 0.0
        %885 = vmatprep.subr.mxu0 0.0
        %886 = vmatpush2.msra.mxu0 0.0
        %887 = vmatprep.subr.mxu0 0.0
        %888 = vmatpush2.msra.mxu0 0.0
        %889 = vmatprep.subr.mxu0 0.0
        %890 = vmatpush2.msra.mxu0 0.0
        %891 = vmatprep.subr.mxu0 0.0
        %892 = vmatpush2.msra.mxu0 0.0
        %893 = vmatprep.subr.mxu0 0.0
        %894 = vmatpush2.msra.mxu0 0.0
        %895 = vmatprep.subr.mxu0 0.0
        %896 = vmatpush2.msra.mxu0 0.0
        %897 = vmatprep.subr.mxu0 0.0
        %898 = vmatpush2.msra.mxu0 0.0
        %899 = vmatprep.subr.mxu0 0.0
        %900 = vmatpush2.msra.mxu0 0.0
        %901 = vmatprep.subr.mxu0 0.0
        %902 = vmatpush2.msra.mxu0 0.0
        %903 = vmatprep.subr.mxu0 0.0
        %904 = vmatpush2.msra.mxu0 0.0
        %905 = vmatprep.subr.mxu0 0.0
        %906 = vmatpush2.msra.mxu0 0.0
        %907 = vmatprep.mubr.f32.mxu0 0.0
        %908 = vmatmul.mubr.f32.gmra.mxu0 %v841
        %v909 = vpop.f32.mrf.mxu0
        %v910 = vadd.f32 0.0, %v909
        %v911 = vpop.f32.mrf.mxu0
        %912 = vdwg.mxu0
        %v913 = vrcp.pop %v835
        %v914 = vmul.f32 1.0, %v913
        %v915 = vmul.f32 %v910, %v914
        %917 = vrot.lane.b32.xlu0 %v915, 8
        %v918 = vpop.permute.xlu0 %917
        %vm920 = vcmask 130112
        %921 = vst.msk [vmem:[#allocation5] sm:$0xff] %vm920, %v918
        %922 = vrot.lane.b32.xlu0 %v575, 112
        %v923 = vpop.permute.xlu0 %922
        %924 = vrot.lane.b32.xlu0 %v576, 112
        %v925 = vpop.permute.xlu0 %924
        %v926 = vsel %vm586, %v923, 0
        %v928 = vsel %vm586, %v925, 0
        %930 = vmatprep.subr.mxu0 0.0
        %931 = vmatpush1.xpose.msra.mxu0 0.0
        %932 = vmatprep.subr.mxu0 0.0
        %933 = vmatpush1.xpose.msra.mxu0 0.0
        %934 = vmatprep.subr.mxu0 0.0
        %935 = vmatpush1.xpose.msra.mxu0 0.0
        %936 = vmatprep.subr.mxu0 0.0
        %937 = vmatpush1.xpose.msra.mxu0 0.0
        %938 = vmatprep.subr.mxu0 0.0
        %939 = vmatpush1.xpose.msra.mxu0 0.0
        %940 = vmatprep.subr.mxu0 0.0
        %941 = vmatpush1.xpose.msra.mxu0 0.0
        %942 = vmatprep.subr.mxu0 0.0
        %943 = vmatpush1.xpose.msra.mxu0 0.0
        %944 = vmatprep.subr.mxu0 0.0
        %945 = vmatpush1.xpose.msra.mxu0 0.0
        %946 = vmatprep.subr.mxu0 0.0
        %947 = vmatpush1.xpose.msra.mxu0 0.0
        %948 = vmatprep.subr.mxu0 0.0
        %949 = vmatpush1.xpose.msra.mxu0 0.0
        %950 = vmatprep.subr.mxu0 0.0
        %951 = vmatpush1.xpose.msra.mxu0 0.0
        %952 = vmatprep.subr.mxu0 0.0
        %953 = vmatpush1.xpose.msra.mxu0 0.0
        %954 = vmatprep.subr.mxu0 0.0
        %955 = vmatpush1.xpose.msra.mxu0 0.0
        %956 = vmatprep.subr.mxu0 0.0
        %957 = vmatpush1.xpose.msra.mxu0 0.0
        %958 = vmatprep.subr.mxu0 0.0
        %959 = vmatpush1.xpose.msra.mxu0 0.0
        %960 = vmatprep.subr.mxu0 0.0
        %961 = vmatpush1.xpose.msra.mxu0 %v928
        %962 = vmatprep.subr.mxu0 0.0
        %963 = vmatpush2.xpose.msra.mxu0 0.0
        %964 = vmatprep.subr.mxu0 0.0
        %965 = vmatpush2.xpose.msra.mxu0 0.0
        %966 = vmatprep.subr.mxu0 0.0
        %967 = vmatpush2.xpose.msra.mxu0 0.0
        %968 = vmatprep.subr.mxu0 0.0
        %969 = vmatpush2.xpose.msra.mxu0 0.0
        %970 = vmatprep.subr.mxu0 0.0
        %971 = vmatpush2.xpose.msra.mxu0 0.0
        %972 = vmatprep.subr.mxu0 0.0
        %973 = vmatpush2.xpose.msra.mxu0 0.0
        %974 = vmatprep.subr.mxu0 0.0
        %975 = vmatpush2.xpose.msra.mxu0 0.0
        %976 = vmatprep.subr.mxu0 0.0
        %977 = vmatpush2.xpose.msra.mxu0 0.0
        %978 = vmatprep.subr.mxu0 0.0
        %979 = vmatpush2.xpose.msra.mxu0 0.0
        %980 = vmatprep.subr.mxu0 0.0
        %981 = vmatpush2.xpose.msra.mxu0 0.0
        %982 = vmatprep.subr.mxu0 0.0
        %983 = vmatpush2.xpose.msra.mxu0 0.0
        %984 = vmatprep.subr.mxu0 0.0
        %985 = vmatpush2.xpose.msra.mxu0 0.0
        %986 = vmatprep.subr.mxu0 0.0
        %987 = vmatpush2.xpose.msra.mxu0 0.0
        %988 = vmatprep.subr.mxu0 0.0
        %989 = vmatpush2.xpose.msra.mxu0 0.0
        %990 = vmatprep.subr.mxu0 0.0
        %991 = vmatpush2.xpose.msra.mxu0 0.0
        %992 = vmatprep.subr.mxu0 0.0
        %993 = vmatpush2.xpose.msra.mxu0 0.0
        %994 = vmatprep.mubr.f32.mxu0 0.0
        %995 = vmatmul.mubr.f32.gmra.mxu0 %v926
        %v996 = vpop.f32.mrf.mxu0
        %v997 = vadd.f32 %v585, %v996
        %v998 = vpop.f32.mrf.mxu0
        %999 = vdwg.mxu0
        %v1000 = vsel %vm586, %v997, -inf
        %1001 = vmax.xlane.f32.xlu0 %v1000
        %v1002 = vpop.xlane.xlu0 %1001
        %v1003 = vsub.f32 %v997, %v1002
        %v1004 = vmul.f32 %v1003, 1.442695
        %v1005 = vpow.pop %v1004
        %v1006 = vsel %vm586, %v1005, 0.0
        %1007 = vadd.xlane.f32.xlu0 %v1006
        %v1008 = vpop.xlane.xlu0 %1007
        %1009 = vrot.lane.b32.xlu0 %v577, 112
        %v1010 = vpop.permute.xlu0 %1009
        %v1013 = vsel %vm586, %v1005, 0
        %1015 = vmatprep.subr.mxu0 0.0
        %1016 = vmatpush1.msra.mxu0 0.0
        %1017 = vmatprep.subr.mxu0 0.0
        %1018 = vmatpush1.msra.mxu0 0.0
        %1019 = vmatprep.subr.mxu0 0.0
        %1020 = vmatpush1.msra.mxu0 0.0
        %1021 = vmatprep.subr.mxu0 0.0
        %1022 = vmatpush1.msra.mxu0 0.0
        %1023 = vmatprep.subr.mxu0 0.0
        %1024 = vmatpush1.msra.mxu0 0.0
        %1025 = vmatprep.subr.mxu0 0.0
        %1026 = vmatpush1.msra.mxu0 0.0
        %1027 = vmatprep.subr.mxu0 0.0
        %1028 = vmatpush1.msra.mxu0 0.0
        %1029 = vmatprep.subr.mxu0 0.0
        %1030 = vmatpush1.msra.mxu0 0.0
        %1031 = vmatprep.subr.mxu0 0.0
        %1032 = vmatpush1.msra.mxu0 0.0
        %1033 = vmatprep.subr.mxu0 0.0
        %1034 = vmatpush1.msra.mxu0 0.0
        %1035 = vmatprep.subr.mxu0 0.0
        %1036 = vmatpush1.msra.mxu0 0.0
        %1037 = vmatprep.subr.mxu0 0.0
        %1038 = vmatpush1.msra.mxu0 0.0
        %1039 = vmatprep.subr.mxu0 0.0
        %1040 = vmatpush1.msra.mxu0 0.0
        %1041 = vmatprep.subr.mxu0 0.0
        %1042 = vmatpush1.msra.mxu0 0.0
        %1043 = vmatprep.subr.mxu0 0.0
        %1044 = vmatpush1.msra.mxu0 0.0
        %1045 = vmatprep.subr.mxu0 0.0
        %1046 = vmatpush1.msra.mxu0 %v1010
        %1047 = vmatprep.subr.mxu0 0.0
        %1048 = vmatpush2.msra.mxu0 0.0
        %1049 = vmatprep.subr.mxu0 0.0
        %1050 = vmatpush2.msra.mxu0 0.0
        %1051 = vmatprep.subr.mxu0 0.0
        %1052 = vmatpush2.msra.mxu0 0.0
        %1053 = vmatprep.subr.mxu0 0.0
        %1054 = vmatpush2.msra.mxu0 0.0
        %1055 = vmatprep.subr.mxu0 0.0
        %1056 = vmatpush2.msra.mxu0 0.0
        %1057 = vmatprep.subr.mxu0 0.0
        %1058 = vmatpush2.msra.mxu0 0.0
        %1059 = vmatprep.subr.mxu0 0.0
        %1060 = vmatpush2.msra.mxu0 0.0
        %1061 = vmatprep.subr.mxu0 0.0
        %1062 = vmatpush2.msra.mxu0 0.0
        %1063 = vmatprep.subr.mxu0 0.0
        %1064 = vmatpush2.msra.mxu0 0.0
        %1065 = vmatprep.subr.mxu0 0.0
        %1066 = vmatpush2.msra.mxu0 0.0
        %1067 = vmatprep.subr.mxu0 0.0
        %1068 = vmatpush2.msra.mxu0 0.0
        %1069 = vmatprep.subr.mxu0 0.0
        %1070 = vmatpush2.msra.mxu0 0.0
        %1071 = vmatprep.subr.mxu0 0.0
        %1072 = vmatpush2.msra.mxu0 0.0
        %1073 = vmatprep.subr.mxu0 0.0
        %1074 = vmatpush2.msra.mxu0 0.0
        %1075 = vmatprep.subr.mxu0 0.0
        %1076 = vmatpush2.msra.mxu0 0.0
        %1077 = vmatprep.subr.mxu0 0.0
        %1078 = vmatpush2.msra.mxu0 0.0
        %1079 = vmatprep.mubr.f32.mxu0 0.0
        %1080 = vmatmul.mubr.f32.gmra.mxu0 %v1013
        %v1081 = vpop.f32.mrf.mxu0
        %v1082 = vadd.f32 0.0, %v1081
        %v1083 = vpop.f32.mrf.mxu0
        %1084 = vdwg.mxu0
        %v1085 = vrcp.pop %v1008
        %v1086 = vmul.f32 1.0, %v1085
        %v1087 = vmul.f32 %v1082, %v1086
        %1089 = vrot.lane.b32.xlu0 %v1087, 16
        %v1090 = vpop.permute.xlu0 %1089
        %vm1092 = vcmask 195712
        %1093 = vst.msk [vmem:[#allocation5] sm:$0xff] %vm1092, %v1090
        %1094 = vrot.lane.b32.xlu0 %v575, 104
        %v1095 = vpop.permute.xlu0 %1094
        %1096 = vrot.lane.b32.xlu0 %v576, 104
        %v1097 = vpop.permute.xlu0 %1096
        %v1098 = vsel %vm586, %v1095, 0
        %v1100 = vsel %vm586, %v1097, 0
        %1102 = vmatprep.subr.mxu0 0.0
        %1103 = vmatpush1.xpose.msra.mxu0 0.0
        %1104 = vmatprep.subr.mxu0 0.0
        %1105 = vmatpush1.xpose.msra.mxu0 0.0
        %1106 = vmatprep.subr.mxu0 0.0
        %1107 = vmatpush1.xpose.msra.mxu0 0.0
        %1108 = vmatprep.subr.mxu0 0.0
        %1109 = vmatpush1.xpose.msra.mxu0 0.0
        %1110 = vmatprep.subr.mxu0 0.0
        %1111 = vmatpush1.xpose.msra.mxu0 0.0
        %1112 = vmatprep.subr.mxu0 0.0
        %1113 = vmatpush1.xpose.msra.mxu0 0.0
        %1114 = vmatprep.subr.mxu0 0.0
        %1115 = vmatpush1.xpose.msra.mxu0 0.0
        %1116 = vmatprep.subr.mxu0 0.0
        %1117 = vmatpush1.xpose.msra.mxu0 0.0
        %1118 = vmatprep.subr.mxu0 0.0
        %1119 = vmatpush1.xpose.msra.mxu0 0.0
        %1120 = vmatprep.subr.mxu0 0.0
        %1121 = vmatpush1.xpose.msra.mxu0 0.0
        %1122 = vmatprep.subr.mxu0 0.0
        %1123 = vmatpush1.xpose.msra.mxu0 0.0
        %1124 = vmatprep.subr.mxu0 0.0
        %1125 = vmatpush1.xpose.msra.mxu0 0.0
        %1126 = vmatprep.subr.mxu0 0.0
        %1127 = vmatpush1.xpose.msra.mxu0 0.0
        %1128 = vmatprep.subr.mxu0 0.0
        %1129 = vmatpush1.xpose.msra.mxu0 0.0
        %1130 = vmatprep.subr.mxu0 0.0
        %1131 = vmatpush1.xpose.msra.mxu0 0.0
        %1132 = vmatprep.subr.mxu0 0.0
        %1133 = vmatpush1.xpose.msra.mxu0 %v1100
        %1134 = vmatprep.subr.mxu0 0.0
        %1135 = vmatpush2.xpose.msra.mxu0 0.0
        %1136 = vmatprep.subr.mxu0 0.0
        %1137 = vmatpush2.xpose.msra.mxu0 0.0
        %1138 = vmatprep.subr.mxu0 0.0
        %1139 = vmatpush2.xpose.msra.mxu0 0.0
        %1140 = vmatprep.subr.mxu0 0.0
        %1141 = vmatpush2.xpose.msra.mxu0 0.0
        %1142 = vmatprep.subr.mxu0 0.0
        %1143 = vmatpush2.xpose.msra.mxu0 0.0
        %1144 = vmatprep.subr.mxu0 0.0
        %1145 = vmatpush2.xpose.msra.mxu0 0.0
        %1146 = vmatprep.subr.mxu0 0.0
        %1147 = vmatpush2.xpose.msra.mxu0 0.0
        %1148 = vmatprep.subr.mxu0 0.0
        %1149 = vmatpush2.xpose.msra.mxu0 0.0
        %1150 = vmatprep.subr.mxu0 0.0
        %1151 = vmatpush2.xpose.msra.mxu0 0.0
        %1152 = vmatprep.subr.mxu0 0.0
        %1153 = vmatpush2.xpose.msra.mxu0 0.0
        %1154 = vmatprep.subr.mxu0 0.0
        %1155 = vmatpush2.xpose.msra.mxu0 0.0
        %1156 = vmatprep.subr.mxu0 0.0
        %1157 = vmatpush2.xpose.msra.mxu0 0.0
        %1158 = vmatprep.subr.mxu0 0.0
        %1159 = vmatpush2.xpose.msra.mxu0 0.0
        %1160 = vmatprep.subr.mxu0 0.0
        %1161 = vmatpush2.xpose.msra.mxu0 0.0
        %1162 = vmatprep.subr.mxu0 0.0
        %1163 = vmatpush2.xpose.msra.mxu0 0.0
        %1164 = vmatprep.subr.mxu0 0.0
        %1165 = vmatpush2.xpose.msra.mxu0 0.0
        %1166 = vmatprep.mubr.f32.mxu0 0.0
        %1167 = vmatmul.mubr.f32.gmra.mxu0 %v1098
        %v1168 = vpop.f32.mrf.mxu0
        %v1169 = vadd.f32 %v585, %v1168
        %v1170 = vpop.f32.mrf.mxu0
        %1171 = vdwg.mxu0
        %v1172 = vsel %vm586, %v1169, -inf
        %1173 = vmax.xlane.f32.xlu0 %v1172
        %v1174 = vpop.xlane.xlu0 %1173
        %v1175 = vsub.f32 %v1169, %v1174
        %v1176 = vmul.f32 %v1175, 1.442695
        %v1177 = vpow.pop %v1176
        %v1178 = vsel %vm586, %v1177, 0.0
        %1179 = vadd.xlane.f32.xlu0 %v1178
        %v1180 = vpop.xlane.xlu0 %1179
        %1181 = vrot.lane.b32.xlu0 %v577, 104
        %v1182 = vpop.permute.xlu0 %1181
        %v1185 = vsel %vm586, %v1177, 0
        %1187 = vmatprep.subr.mxu0 0.0
        %1188 = vmatpush1.msra.mxu0 0.0
        %1189 = vmatprep.subr.mxu0 0.0
        %1190 = vmatpush1.msra.mxu0 0.0
        %1191 = vmatprep.subr.mxu0 0.0
        %1192 = vmatpush1.msra.mxu0 0.0
        %1193 = vmatprep.subr.mxu0 0.0
        %1194 = vmatpush1.msra.mxu0 0.0
        %1195 = vmatprep.subr.mxu0 0.0
        %1196 = vmatpush1.msra.mxu0 0.0
        %1197 = vmatprep.subr.mxu0 0.0
        %1198 = vmatpush1.msra.mxu0 0.0
        %1199 = vmatprep.subr.mxu0 0.0
        %1200 = vmatpush1.msra.mxu0 0.0
        %1201 = vmatprep.subr.mxu0 0.0
        %1202 = vmatpush1.msra.mxu0 0.0
        %1203 = vmatprep.subr.mxu0 0.0
        %1204 = vmatpush1.msra.mxu0 0.0
        %1205 = vmatprep.subr.mxu0 0.0
        %1206 = vmatpush1.msra.mxu0 0.0
        %1207 = vmatprep.subr.mxu0 0.0
        %1208 = vmatpush1.msra.mxu0 0.0
        %1209 = vmatprep.subr.mxu0 0.0
        %1210 = vmatpush1.msra.mxu0 0.0
        %1211 = vmatprep.subr.mxu0 0.0
        %1212 = vmatpush1.msra.mxu0 0.0
        %1213 = vmatprep.subr.mxu0 0.0
        %1214 = vmatpush1.msra.mxu0 0.0
        %1215 = vmatprep.subr.mxu0 0.0
        %1216 = vmatpush1.msra.mxu0 0.0
        %1217 = vmatprep.subr.mxu0 0.0
        %1218 = vmatpush1.msra.mxu0 %v1182
        %1219 = vmatprep.subr.mxu0 0.0
        %1220 = vmatpush2.msra.mxu0 0.0
        %1221 = vmatprep.subr.mxu0 0.0
        %1222 = vmatpush2.msra.mxu0 0.0
        %1223 = vmatprep.subr.mxu0 0.0
        %1224 = vmatpush2.msra.mxu0 0.0
        %1225 = vmatprep.subr.mxu0 0.0
        %1226 = vmatpush2.msra.mxu0 0.0
        %1227 = vmatprep.subr.mxu0 0.0
        %1228 = vmatpush2.msra.mxu0 0.0
        %1229 = vmatprep.subr.mxu0 0.0
        %1230 = vmatpush2.msra.mxu0 0.0
        %1231 = vmatprep.subr.mxu0 0.0
        %1232 = vmatpush2.msra.mxu0 0.0
        %1233 = vmatprep.subr.mxu0 0.0
        %1234 = vmatpush2.msra.mxu0 0.0
        %1235 = vmatprep.subr.mxu0 0.0
        %1236 = vmatpush2.msra.mxu0 0.0
        %1237 = vmatprep.subr.mxu0 0.0
        %1238 = vmatpush2.msra.mxu0 0.0
        %1239 = vmatprep.subr.mxu0 0.0
        %1240 = vmatpush2.msra.mxu0 0.0
        %1241 = vmatprep.subr.mxu0 0.0
        %1242 = vmatpush2.msra.mxu0 0.0
        %1243 = vmatprep.subr.mxu0 0.0
        %1244 = vmatpush2.msra.mxu0 0.0
        %1245 = vmatprep.subr.mxu0 0.0
        %1246 = vmatpush2.msra.mxu0 0.0
        %1247 = vmatprep.subr.mxu0 0.0
        %1248 = vmatpush2.msra.mxu0 0.0
        %1249 = vmatprep.subr.mxu0 0.0
        %1250 = vmatpush2.msra.mxu0 0.0
        %1251 = vmatprep.mubr.f32.mxu0 0.0
        %1252 = vmatmul.mubr.f32.gmra.mxu0 %v1185
        %v1253 = vpop.f32.mrf.mxu0
        %v1254 = vadd.f32 0.0, %v1253
        %v1255 = vpop.f32.mrf.mxu0
        %1256 = vdwg.mxu0
        %v1257 = vrcp.pop %v1180
        %v1258 = vmul.f32 1.0, %v1257
        %v1259 = vmul.f32 %v1254, %v1258
        %1261 = vrot.lane.b32.xlu0 %v1259, 24
        %v1262 = vpop.permute.xlu0 %1261
        %vm1264 = vcmask 261312
        %1265 = vst.msk [vmem:[#allocation5] sm:$0xff] %vm1264, %v1262
        %v1266 = vld [vmem:[#allocation5] sm:$0xff]
        %v1267 = vld [vmem:[#allocation14] sm:$0xff]
        %v1268 = vld [vmem:[#allocation14 + $0x8] sm:$0xff]
        %v1269 = vld [vmem:[#allocation14 + $0x10] sm:$0xff]
        %v1270 = vld [vmem:[#allocation14 + $0x18] sm:$0xff]
        %v1271 = vld [vmem:[%s5] sm:$0x1]
        %v1273 = vlaneseq
        %v1274 = vshrl.u32 %v1273, 7
        %v1275 = vsub.s32 0, %v1274
        %v1276 = vrot.slane %v1271, %v1275
        %vm1278 = vcmask 261120
        %v1280 = vsel %vm1278, %v1266, 0
        %1282 = vmatprep.subr.mxu0 0.0
        %1283 = vmatpush1.msra.mxu0 0.0
        %1284 = vmatprep.subr.mxu0 0.0
        %1285 = vmatpush1.msra.mxu0 0.0
        %1286 = vmatprep.subr.mxu0 0.0
        %1287 = vmatpush1.msra.mxu0 0.0
        %1288 = vmatprep.subr.mxu0 0.0
        %1289 = vmatpush1.msra.mxu0 0.0
        %1290 = vmatprep.subr.mxu0 0.0
        %1291 = vmatpush1.msra.mxu0 0.0
        %1292 = vmatprep.subr.mxu0 0.0
        %1293 = vmatpush1.msra.mxu0 0.0
        %1294 = vmatprep.subr.mxu0 0.0
        %1295 = vmatpush1.msra.mxu0 0.0
        %1296 = vmatprep.subr.mxu0 0.0
        %1297 = vmatpush1.msra.mxu0 0.0
        %1298 = vmatprep.subr.mxu0 0.0
        %1299 = vmatpush1.msra.mxu0 0.0
        %1300 = vmatprep.subr.mxu0 0.0
        %1301 = vmatpush1.msra.mxu0 0.0
        %1302 = vmatprep.subr.mxu0 0.0
        %1303 = vmatpush1.msra.mxu0 0.0
        %1304 = vmatprep.subr.mxu0 0.0
        %1305 = vmatpush1.msra.mxu0 0.0
        %1306 = vmatprep.subr.mxu0 0.0
        %1307 = vmatpush1.msra.mxu0 %v1270
        %1308 = vmatprep.subr.mxu0 0.0
        %1309 = vmatpush1.msra.mxu0 %v1269
        %1310 = vmatprep.subr.mxu0 0.0
        %1311 = vmatpush1.msra.mxu0 %v1268
        %1312 = vmatprep.subr.mxu0 0.0
        %1313 = vmatpush1.msra.mxu0 %v1267
        %1314 = vmatprep.subr.mxu0 0.0
        %1315 = vmatpush2.msra.mxu0 0.0
        %1316 = vmatprep.subr.mxu0 0.0
        %1317 = vmatpush2.msra.mxu0 0.0
        %1318 = vmatprep.subr.mxu0 0.0
        %1319 = vmatpush2.msra.mxu0 0.0
        %1320 = vmatprep.subr.mxu0 0.0
        %1321 = vmatpush2.msra.mxu0 0.0
        %1322 = vmatprep.subr.mxu0 0.0
        %1323 = vmatpush2.msra.mxu0 0.0
        %1324 = vmatprep.subr.mxu0 0.0
        %1325 = vmatpush2.msra.mxu0 0.0
        %1326 = vmatprep.subr.mxu0 0.0
        %1327 = vmatpush2.msra.mxu0 0.0
        %1328 = vmatprep.subr.mxu0 0.0
        %1329 = vmatpush2.msra.mxu0 0.0
        %1330 = vmatprep.subr.mxu0 0.0
        %1331 = vmatpush2.msra.mxu0 0.0
        %1332 = vmatprep.subr.mxu0 0.0
        %1333 = vmatpush2.msra.mxu0 0.0
        %1334 = vmatprep.subr.mxu0 0.0
        %1335 = vmatpush2.msra.mxu0 0.0
        %1336 = vmatprep.subr.mxu0 0.0
        %1337 = vmatpush2.msra.mxu0 0.0
        %1338 = vmatprep.subr.mxu0 0.0
        %1339 = vmatpush2.msra.mxu0 0.0
        %1340 = vmatprep.subr.mxu0 0.0
        %1341 = vmatpush2.msra.mxu0 0.0
        %1342 = vmatprep.subr.mxu0 0.0
        %1343 = vmatpush2.msra.mxu0 0.0
        %1344 = vmatprep.subr.mxu0 0.0
        %1345 = vmatpush2.msra.mxu0 0.0
        %1346 = vmatprep.mubr.f32.mxu0 0.0
        %1347 = vmatmul.mubr.f32.gmra.mxu0 %v1280
        %v1348 = vpop.f32.mrf.mxu0
        %v1349 = vadd.f32 %v1276, %v1348
        %v1350 = vpop.f32.mrf.mxu0
        %1351 = vdwg.mxu0
        %1352 = vst.msk [vmem:[%s338] sm:$0xff] %vm1278, %v1349
        %s1353 = sand.u32 %s178, 1
        %s1354 = scalar_lea.sflag [#allocation8], %s1353
        %s1355 = sand.u32 %s178, 1
        %s1356 = smul.addr %s1355, 8
        %s1357 = scalar_lea.vmem [#allocation15], %s1356
        // Predicated region
        $region69: #{tpu_custom_call.1} parent=43 // pred_check
          %p1358 = pneg %p188
        $region70: #{tpu_custom_call.1} parent=43 // pred_check_branch
          %1360 = sbr.rel (%p1358) target = $region72
        $region71: #{tpu_custom_call.1} parent=43 // pred_region
          %s1362 = ssub.s32 128, 128
          %1363 = vsyncadd %s1354, %s1362
          %s1364 = sadd.s32 %s30, %s29
          %s1365 = smul.addr %s1364, 128
          %s1366 = scalar_lea.hbm %s6, %s1365
          %s1368 = sshll.u32 %s1357, 4
          %s1369 = int_to_ptr.vmem [resolvable:$true] %s1368
          %1371 = dma.vmem_to_hbm [thread:$0]  %s1369, 128, %s1366, %s1354
        $region72: #{tpu_custom_call.1} parent=43 // pred_fallthru
          _
      $region44: #{tpu_custom_call.1} parent=5 // pred_fallthru
        _
      %p1372 = scmp.le.s32.totalorder 2, %s20
      // Predicated region
      $region73: #{tpu_custom_call.1} parent=5 // pred_check
        %p1373 = pneg %p1372
      $region74: #{tpu_custom_call.1} parent=5 // pred_check_branch
        %1375 = sbr.rel (%p1373) target = $region76
      $region75: #{tpu_custom_call.1} parent=5 // pred_region
        %s1376 = ssub.s32 %s20, 2
        // Predicated region
        $region77: #{tpu_custom_call.1} parent=75 // pred_check
          %p1377 = pneg %p194
        $region78: #{tpu_custom_call.1} parent=75 // pred_check_branch
          %1379 = sbr.rel (%p1377) target = $region80
        $region79: #{tpu_custom_call.1} parent=75 // pred_region
          %s1380 = sand.u32 %s179, 1
          %s1381 = scalar_lea.sflag [#allocation8], %s1380
          %s1382 = sand.u32 %s179, 1
          %s1383 = smul.addr %s1382, 8
          %s1384 = scalar_lea.vmem [#allocation15], %s1383
          %1385 = dma.done %s1381, 128
        $region80: #{tpu_custom_call.1} parent=75 // pred_fallthru
          _
      $region76: #{tpu_custom_call.1} parent=5 // pred_fallthru
        _
    $region6: #{tpu_custom_call.1} parent=1 // loop_footer
      %s24 = sadd.s32 1, %s20
    $region7: #{tpu_custom_call.1} parent=1 // loop_footer_branch
      %19 = sbr.rel target = $region3
    $region8: #{tpu_custom_call.1} parent=1 // loop_exit
      _
    %1386 = vsyncpa [#allocation7], 1
    %s1387 = scalar_lea.sflag [#allocation7], 1
    %1388 = vsyncpa %s1387, 1
    %1389 = vsyncpa [#allocation10], 1
    %1390 = vsyncpa [#allocation13], 1
    %1391 = vsyncpa [#allocation8], 1
    %s1392 = scalar_lea.sflag [#allocation8], 1
    %1393 = vsyncpa %s1392, 1

</llo_original>
